<compile_context>
chip_gen: v6e
topology: v6e:2x2x1
jax: 0.10.0
libtpu: 0.0.40
codegen_flags: <defaults>
</compile_context>

<pallas_src>
import jax
import jax.numpy as jnp
from jax.experimental import pallas as pl
from jax.experimental.pallas import tpu as pltpu

D_MODEL = 32          # n
N_HEAD = 2
HEAD_DIM = D_MODEL // N_HEAD
D_FF = 64
N_ENCODER = 2         # encoder_layer count (shared-weight layer repeated)
SEQ = 8
BATCH = 2
SB = SEQ * BATCH      # flattened (seq, batch) rows per example
LN_EPS = 1e-5
LANE = 128

# packed weight-slab row offsets (all multiples of 8, all lane-offset 0)
R_QKVO, R_W1, R_W2, R_WF = 0, 32, 64, 128
W_ROWS = 160
B_ROWS = 8


def _layer_norm(v, g, b):
    mu = jnp.mean(v, axis=-1, keepdims=True)
    c = v - mu
    var = jnp.mean(c * c, axis=-1, keepdims=True)
    return c * jax.lax.rsqrt(var + LN_EPS) * g + b


def tfm_kernel(x_ref, w_ref, b_ref, y_ref):
    # x_ref: (1, SB, 32)   one example, row = s*BATCH + b
    # w_ref: (160, 128)    packed weights (scale & Wv@Wo & bo folded in)
    # b_ref: (8, 128)      1-row biases / LN params, one per sublane row
    # y_ref: (1, SB, 128)  sigmoid output broadcast across lanes (lane-dense)
    h = x_ref[0]                                               # (SB, 32)

    # ---- hot weights, hoisted once (small vreg footprint) ----
    w_qkvo = w_ref[R_QKVO:R_QKVO + D_MODEL, :]                 # (32, 128)
    w1 = w_ref[R_W1:R_W1 + D_MODEL, 0:D_FF]                    # (32, 64)
    w2 = w_ref[R_W2:R_W2 + D_FF, 0:D_MODEL]                    # (64, 32)

    # ---- 1-row biases / LN params (sublane broadcast is free on use) ----
    b_qkvo = b_ref[0:1, :]                                     # (1, 128)
    g1 = b_ref[1:2, 0:D_MODEL]
    be1 = b_ref[2:3, 0:D_MODEL]
    b1 = b_ref[3:4, 0:D_FF]
    b2 = b_ref[4:5, 0:D_MODEL]
    g2 = b_ref[5:6, 0:D_MODEL]
    be2 = b_ref[6:7, 0:D_MODEL]

    # ---- cross-batch attention mask (rows ordered (s, b), b fastest) ----
    row_b = jax.lax.broadcasted_iota(jnp.int32, (SB, SB), 0) % BATCH
    col_b = jax.lax.broadcasted_iota(jnp.int32, (SB, SB), 1) % BATCH
    mask = (row_b != col_b).astype(jnp.float32) * (-1e30)      # (SB, SB)

    for _ in range(N_ENCODER):        # shared weights every iteration
        # one lane-dense GEMM: [Q*scale | K | V0@Wo0 (+bo) | V1@Wo1]
        qkvo = jnp.dot(h, w_qkvo, preferred_element_type=jnp.float32) + b_qkvo

        attn = None
        for hh in range(N_HEAD):      # unrolled: both heads' MXU pushes overlap
            qh = qkvo[:, hh * HEAD_DIM:(hh + 1) * HEAD_DIM]              # (SB,16)
            kh = qkvo[:, D_MODEL + hh * HEAD_DIM:
                         D_MODEL + (hh + 1) * HEAD_DIM]                  # (SB,16)
            vo = qkvo[:, 2 * D_MODEL + hh * D_MODEL:
                         2 * D_MODEL + (hh + 1) * D_MODEL]               # (SB,32)
            # q @ k^T without materializing a transpose
            sc = jax.lax.dot_general(
                qh, kh, (((1,), (1,)), ((), ())),
                preferred_element_type=jnp.float32) + mask               # (SB,SB)
            sc = sc - jnp.max(sc, axis=-1, keepdims=True)
            p = jnp.exp(sc)
            p = p / jnp.sum(p, axis=-1, keepdims=True)
            contrib = jnp.dot(p, vo, preferred_element_type=jnp.float32)  # (SB,32)
            attn = contrib if attn is None else attn + contrib

        h = _layer_norm(h + attn, g1, be1)

        # feed-forward
        ff = jnp.maximum(
            jnp.dot(h, w1, preferred_element_type=jnp.float32) + b1, 0.0)
        ff = jnp.dot(ff, w2, preferred_element_type=jnp.float32) + b2
        h = _layer_norm(h + ff, g2, be2)

        # ReLU appended after every encoder layer in the Sequential
        h = jnp.maximum(h, 0.0)

    # forward: relu1(encoder(x)) is idempotent here (layer already ends in ReLU)
    wf = w_ref[R_WF:R_WF + D_MODEL, 0:1]                       # (32, 1), read once
    bf = b_ref[7:8, 0:1]                                       # (1, 1)
    logits = jnp.dot(h, wf, preferred_element_type=jnp.float32) + bf   # (SB, 1)
    y = 1.0 / (1.0 + jnp.exp(-logits))
    # lane-dense store (unmasked vst); lane 0 is sliced host-side
    y_ref[0] = jnp.broadcast_to(y, (SB, LANE))


@jax.jit
def tfm_forward(x, wslab, bslab):
    # x: (n_examples, SEQ, BATCH, D_MODEL); each example is one module forward.
    nex = x.shape[0]
    x_flat = x.reshape(nex, SB, D_MODEL)      # host-side reshape: free
    y = pl.pallas_call(
        tfm_kernel,
        out_shape=jax.ShapeDtypeStruct((nex, SB, LANE), jnp.float32),
        grid=(nex,),
        in_specs=[
            pl.BlockSpec((1, SB, D_MODEL), lambda e: (e, 0, 0)),
            pl.BlockSpec((W_ROWS, LANE), lambda e: (0, 0)),
            pl.BlockSpec((B_ROWS, LANE), lambda e: (0, 0)),
        ],
        out_specs=pl.BlockSpec((1, SB, LANE), lambda e: (e, 0, 0)),
        compiler_params=pltpu.CompilerParams(
            dimension_semantics=("parallel",)),
    )(x_flat, wslab, bslab)
    return y[:, :, 0:1].reshape(nex, SEQ, BATCH, 1)


def pack_params(params):
    """Pack the 18 parameter arrays into 2 VMEM slabs.

    Folds the attention scale into Wq/bq and the per-head value/output
    projections (Wv_h @ Wo_h, bv_h @ Wo_h, plus bo into head 0) so the kernel
    needs only one 128-lane QKVO GEMM per layer.  Exact: softmax rows sum to 1,
    so the folded value-path bias passes through attention unchanged.
    """
    (wq, bq, wk, bk, wv, bv, wo, bo, g1, be1,
     w1, b1, w2, b2, g2, be2, wf, bf) = params
    scale = float(HEAD_DIM) ** -0.5

    wvo0 = wv[:, 0:HEAD_DIM] @ wo[0:HEAD_DIM, :]                 # (32, 32)
    wvo1 = wv[:, HEAD_DIM:D_MODEL] @ wo[HEAD_DIM:D_MODEL, :]     # (32, 32)
    bvo0 = bv[:, 0:HEAD_DIM] @ wo[0:HEAD_DIM, :] + bo            # (1, 32)
    bvo1 = bv[:, HEAD_DIM:D_MODEL] @ wo[HEAD_DIM:D_MODEL, :]     # (1, 32)
    w_qkvo = jnp.concatenate([wq * scale, wk, wvo0, wvo1], axis=1)   # (32, 128)
    b_qkvo = jnp.concatenate([bq * scale, bk, bvo0, bvo1], axis=1)   # (1, 128)

    wslab = jnp.zeros((W_ROWS, LANE), jnp.float32)
    wslab = wslab.at[R_QKVO:R_QKVO + D_MODEL, :].set(w_qkvo)
    wslab = wslab.at[R_W1:R_W1 + D_MODEL, 0:D_FF].set(w1)
    wslab = wslab.at[R_W2:R_W2 + D_FF, 0:D_MODEL].set(w2)
    wslab = wslab.at[R_WF:R_WF + D_MODEL, 0:1].set(wf)

    bslab = jnp.zeros((B_ROWS, LANE), jnp.float32)
    bslab = bslab.at[0, :].set(b_qkvo[0])
    bslab = bslab.at[1, 0:D_MODEL].set(g1[0])
    bslab = bslab.at[2, 0:D_MODEL].set(be1[0])
    bslab = bslab.at[3, 0:D_FF].set(b1[0])
    bslab = bslab.at[4, 0:D_MODEL].set(b2[0])
    bslab = bslab.at[5, 0:D_MODEL].set(g2[0])
    bslab = bslab.at[6, 0:D_MODEL].set(be2[0])
    bslab = bslab.at[7, 0:1].set(bf[0])
    return wslab, bslab


def tfm_reference(x, params):
    """Plain-JAX reference mirroring PyTorch TransformerEncoderLayer
    (post-norm, per-batch softmax, shared layer weights), eval mode."""
    (wq, bq, wk, bk, wv, bv, wo, bo, g1, be1,
     w1, b1, w2, b2, g2, be2, wf, bf) = params
    S, B, N = x.shape

    def layer_norm(v, g, b):
        mu = v.mean(-1, keepdims=True)
        var = ((v - mu) ** 2).mean(-1, keepdims=True)
        return (v - mu) / jnp.sqrt(var + LN_EPS) * g + b

    h = x
    for _ in range(N_ENCODER):
        q = h @ wq + bq
        k = h @ wk + bk
        v = h @ wv + bv
        qh = q.reshape(S, B, N_HEAD, HEAD_DIM).transpose(1, 2, 0, 3)
        kh = k.reshape(S, B, N_HEAD, HEAD_DIM).transpose(1, 2, 0, 3)
        vh = v.reshape(S, B, N_HEAD, HEAD_DIM).transpose(1, 2, 0, 3)
        sc = jnp.einsum('bhsd,bhtd->bhst', qh, kh) / jnp.sqrt(float(HEAD_DIM))
        p = jax.nn.softmax(sc, axis=-1)
        a = jnp.einsum('bhst,bhtd->bhsd', p, vh)
        a = a.transpose(2, 0, 1, 3).reshape(S, B, N)
        a = a @ wo + bo
        h = layer_norm(h + a, g1, be1)
        ff = jax.nn.relu(h @ w1 + b1) @ w2 + b2
        h = layer_norm(h + ff, g2, be2)
        h = jax.nn.relu(h)
    h = jax.nn.relu(h)
    return jax.nn.sigmoid(h @ wf + bf)


def init_params(key):
    ks = jax.random.split(key, 7)

    def lin(k, fan_in, fan_out):
        kw, kb = jax.random.split(k)
        bound = 1.0 / (fan_in ** 0.5)
        # stored pre-transposed: (in, out), so kernel computes x @ W
        w = jax.random.uniform(kw, (fan_in, fan_out), jnp.float32, -bound, bound)
        b = jax.random.uniform(kb, (1, fan_out), jnp.float32, -bound, bound)
        return w, b

    wq, bq = lin(ks[0], D_MODEL, D_MODEL)
    wk, bk = lin(ks[1], D_MODEL, D_MODEL)
    wv, bv = lin(ks[2], D_MODEL, D_MODEL)
    wo, bo = lin(ks[3], D_MODEL, D_MODEL)
    w1, b1 = lin(ks[4], D_MODEL, D_FF)
    w2, b2 = lin(ks[5], D_FF, D_MODEL)
    wf, bf = lin(ks[6], D_MODEL, 1)
    g1 = jnp.ones((1, D_MODEL), jnp.float32)
    be1 = jnp.zeros((1, D_MODEL), jnp.float32)
    g2 = jnp.ones((1, D_MODEL), jnp.float32)
    be2 = jnp.zeros((1, D_MODEL), jnp.float32)
    return (wq, bq, wk, bk, wv, bv, wo, bo, g1, be1,
            w1, b1, w2, b2, g2, be2, wf, bf)


if __name__ == "__main__":
    key = jax.random.PRNGKey(0)
    kx, kp = jax.random.split(key)
    NEX = 4   # independent (SEQ, BATCH, D_MODEL) examples in one pallas_call
    x = jax.random.normal(kx, (NEX, SEQ, BATCH, D_MODEL), jnp.float32)
    params = init_params(kp)
    wslab, bslab = pack_params(params)     # one-time host-side packing

    y = tfm_forward(x, wslab, bslab)
    jax.block_until_ready(y)

    y_ref = jax.vmap(lambda xe: tfm_reference(xe, params))(x)
    assert y.shape == (NEX, SEQ, BATCH, 1), y.shape
    assert bool(jnp.all(jnp.isfinite(y)))
    assert jnp.allclose(y, y_ref, atol=1e-2, rtol=1e-2), "mismatch vs JAX reference"
    print("KERNEL_OK")
</pallas_src>

<mosaic_0001>
module attributes {stable_mosaic.version = 11 : i64} {
  func.func @tfm_kernel(%arg0: i32, %arg1: memref<1x16x32xf32, #tpu.memory_space<vmem>>, %arg2: memref<160x128xf32, #tpu.memory_space<vmem>>, %arg3: memref<8x128xf32, #tpu.memory_space<vmem>>, %arg4: memref<1x16x128xf32, #tpu.memory_space<vmem>>) attributes {dimension_semantics = [#tpu.dimension_semantics<parallel>], iteration_bounds = array<i64: 4>, scalar_prefetch = 0 : i64, scratch_operands = 0 : i64, tpu.core_type = #tpu.core_type<tc>, window_params = [{transform_indices = @transform_0, window_bounds = array<i64: 1, 16, 32>}, {pipeline_mode = #tpu.pipeline_mode<synchronous>, transform_indices = @transform_1, window_bounds = array<i64: 160, 128>}, {pipeline_mode = #tpu.pipeline_mode<synchronous>, transform_indices = @transform_2, window_bounds = array<i64: 8, 128>}, {transform_indices = @transform_3, window_bounds = array<i64: 1, 16, 128>}]} {
    %c0 = arith.constant 0 : index
    %c0_0 = arith.constant 0 : index
    %c0_1 = arith.constant 0 : index
    %0 = vector.load %arg1[%c0, %c0_0, %c0_1] : memref<1x16x32xf32, #tpu.memory_space<vmem>>, vector<1x16x32xf32>
    %1 = vector.shape_cast %0 : vector<1x16x32xf32> to vector<16x32xf32>
    %c0_2 = arith.constant 0 : index
    %c0_3 = arith.constant 0 : index
    %2 = vector.load %arg2[%c0_2, %c0_3] : memref<160x128xf32, #tpu.memory_space<vmem>>, vector<32x128xf32>
    %c32 = arith.constant 32 : index
    %c0_4 = arith.constant 0 : index
    %3 = vector.load %arg2[%c32, %c0_4] : memref<160x128xf32, #tpu.memory_space<vmem>>, vector<32x64xf32>
    %c64 = arith.constant 64 : index
    %c0_5 = arith.constant 0 : index
    %4 = vector.load %arg2[%c64, %c0_5] : memref<160x128xf32, #tpu.memory_space<vmem>>, vector<64x32xf32>
    %c0_6 = arith.constant 0 : index
    %c0_7 = arith.constant 0 : index
    %5 = vector.load %arg3[%c0_6, %c0_7] : memref<8x128xf32, #tpu.memory_space<vmem>>, vector<1x128xf32>
    %c1 = arith.constant 1 : index
    %c0_8 = arith.constant 0 : index
    %6 = vector.load %arg3[%c1, %c0_8] : memref<8x128xf32, #tpu.memory_space<vmem>>, vector<1x32xf32>
    %c2 = arith.constant 2 : index
    %c0_9 = arith.constant 0 : index
    %7 = vector.load %arg3[%c2, %c0_9] : memref<8x128xf32, #tpu.memory_space<vmem>>, vector<1x32xf32>
    %c3 = arith.constant 3 : index
    %c0_10 = arith.constant 0 : index
    %8 = vector.load %arg3[%c3, %c0_10] : memref<8x128xf32, #tpu.memory_space<vmem>>, vector<1x64xf32>
    %c4 = arith.constant 4 : index
    %c0_11 = arith.constant 0 : index
    %9 = vector.load %arg3[%c4, %c0_11] : memref<8x128xf32, #tpu.memory_space<vmem>>, vector<1x32xf32>
    %c5 = arith.constant 5 : index
    %c0_12 = arith.constant 0 : index
    %10 = vector.load %arg3[%c5, %c0_12] : memref<8x128xf32, #tpu.memory_space<vmem>>, vector<1x32xf32>
    %c6 = arith.constant 6 : index
    %c0_13 = arith.constant 0 : index
    %11 = vector.load %arg3[%c6, %c0_13] : memref<8x128xf32, #tpu.memory_space<vmem>>, vector<1x32xf32>
    %12 = tpu.iota {dimensions = array<i32: 0>} : vector<16x16xi32>
    %c2_i32 = arith.constant 2 : i32
    %c0_i32 = arith.constant 0 : i32
    %13 = arith.cmpi eq, %c2_i32, %c0_i32 : i32
    %c1_i32 = arith.constant 1 : i32
    %14 = arith.select %13, %c1_i32, %c2_i32 : i32
    %15 = vector.broadcast %14 : i32 to vector<16x16xi32>
    %16 = arith.remsi %12, %15 : vector<16x16xi32>
    %c0_i32_14 = arith.constant 0 : i32
    %17 = vector.broadcast %c0_i32_14 : i32 to vector<16x16xi32>
    %18 = arith.cmpi ne, %16, %17 : vector<16x16xi32>
    %c0_i32_15 = arith.constant 0 : i32
    %19 = vector.broadcast %c0_i32_15 : i32 to vector<16x16xi32>
    %20 = arith.cmpi slt, %16, %19 : vector<16x16xi32>
    %c0_i32_16 = arith.constant 0 : i32
    %21 = arith.cmpi slt, %14, %c0_i32_16 : i32
    %22 = vector.broadcast %21 : i1 to vector<16x16xi1>
    %23 = vector.broadcast %22 : vector<16x16xi1> to vector<16x16xi1>
    %24 = arith.xori %20, %23 : vector<16x16xi1>
    %25 = arith.andi %24, %18 : vector<16x16xi1>
    %26 = vector.broadcast %14 : i32 to vector<16x16xi32>
    %27 = arith.addi %16, %26 : vector<16x16xi32>
    %28 = arith.select %25, %27, %16 : vector<16x16xi1>, vector<16x16xi32>
    %29 = tpu.iota {dimensions = array<i32: 1>} : vector<16x16xi32>
    %c2_i32_17 = arith.constant 2 : i32
    %c0_i32_18 = arith.constant 0 : i32
    %30 = arith.cmpi eq, %c2_i32_17, %c0_i32_18 : i32
    %c1_i32_19 = arith.constant 1 : i32
    %31 = arith.select %30, %c1_i32_19, %c2_i32_17 : i32
    %32 = vector.broadcast %31 : i32 to vector<16x16xi32>
    %33 = arith.remsi %29, %32 : vector<16x16xi32>
    %c0_i32_20 = arith.constant 0 : i32
    %34 = vector.broadcast %c0_i32_20 : i32 to vector<16x16xi32>
    %35 = arith.cmpi ne, %33, %34 : vector<16x16xi32>
    %c0_i32_21 = arith.constant 0 : i32
    %36 = vector.broadcast %c0_i32_21 : i32 to vector<16x16xi32>
    %37 = arith.cmpi slt, %33, %36 : vector<16x16xi32>
    %c0_i32_22 = arith.constant 0 : i32
    %38 = arith.cmpi slt, %31, %c0_i32_22 : i32
    %39 = vector.broadcast %38 : i1 to vector<16x16xi1>
    %40 = vector.broadcast %39 : vector<16x16xi1> to vector<16x16xi1>
    %41 = arith.xori %37, %40 : vector<16x16xi1>
    %42 = arith.andi %41, %35 : vector<16x16xi1>
    %43 = vector.broadcast %31 : i32 to vector<16x16xi32>
    %44 = arith.addi %33, %43 : vector<16x16xi32>
    %45 = arith.select %42, %44, %33 : vector<16x16xi1>, vector<16x16xi32>
    %46 = arith.cmpi ne, %28, %45 : vector<16x16xi32>
    %47 = arith.extui %46 : vector<16x16xi1> to vector<16x16xi32>
    %48 = arith.sitofp %47 : vector<16x16xi32> to vector<16x16xf32>
    %cst = arith.constant -1.000000e+30 : f32
    %49 = vector.broadcast %cst : f32 to vector<16x16xf32>
    %50 = arith.mulf %48, %49 : vector<16x16xf32>
    %cst_23 = arith.constant dense<0.000000e+00> : vector<16x128xf32>
    %51 = tpu.matmul %1, %2, %cst_23 {dimension_numbers = #tpu.dot_dimension_numbers<[1], [0], [0], [1], [0, 0, 1, 1], [], []>} : vector<16x32xf32>, vector<32x128xf32>, vector<16x128xf32> -> vector<16x128xf32>
    %52 = vector.broadcast %5 : vector<1x128xf32> to vector<16x128xf32>
    %53 = arith.addf %51, %52 : vector<16x128xf32>
    %54 = vector.extract_strided_slice %53 {offsets = [0, 0], sizes = [16, 16], strides = [1, 1]} : vector<16x128xf32> to vector<16x16xf32>
    %55 = vector.extract_strided_slice %53 {offsets = [0, 32], sizes = [16, 16], strides = [1, 1]} : vector<16x128xf32> to vector<16x16xf32>
    %56 = vector.extract_strided_slice %53 {offsets = [0, 64], sizes = [16, 32], strides = [1, 1]} : vector<16x128xf32> to vector<16x32xf32>
    %cst_24 = arith.constant dense<0.000000e+00> : vector<16x16xf32>
    %57 = tpu.matmul %54, %55, %cst_24 {dimension_numbers = #tpu.dot_dimension_numbers<[1], [1], [0], [0], [0, 0, 1, 0], [], []>} : vector<16x16xf32>, vector<16x16xf32>, vector<16x16xf32> -> vector<16x16xf32>
    %58 = arith.addf %57, %50 : vector<16x16xf32>
    %cst_25 = arith.constant dense<0xFF800000> : vector<16xf32>
    %59 = vector.multi_reduction <maximumf>, %58, %cst_25 [1] : vector<16x16xf32> to vector<16xf32>
    %60 = vector.shape_cast %59 : vector<16xf32> to vector<16x1xf32>
    %61 = vector.broadcast %60 : vector<16x1xf32> to vector<16x16xf32>
    %62 = arith.subf %58, %61 : vector<16x16xf32>
    %63 = math.exp %62 : vector<16x16xf32>
    %cst_26 = arith.constant dense<0.000000e+00> : vector<16xf32>
    %64 = vector.multi_reduction <add>, %63, %cst_26 [1] : vector<16x16xf32> to vector<16xf32>
    %65 = vector.shape_cast %64 : vector<16xf32> to vector<16x1xf32>
    %66 = vector.broadcast %65 : vector<16x1xf32> to vector<16x16xf32>
    %67 = arith.divf %63, %66 : vector<16x16xf32>
    %cst_27 = arith.constant dense<0.000000e+00> : vector<16x32xf32>
    %68 = tpu.matmul %67, %56, %cst_27 {dimension_numbers = #tpu.dot_dimension_numbers<[1], [0], [0], [1], [0, 0, 1, 1], [], []>} : vector<16x16xf32>, vector<16x32xf32>, vector<16x32xf32> -> vector<16x32xf32>
    %69 = vector.extract_strided_slice %53 {offsets = [0, 16], sizes = [16, 16], strides = [1, 1]} : vector<16x128xf32> to vector<16x16xf32>
    %70 = vector.extract_strided_slice %53 {offsets = [0, 48], sizes = [16, 16], strides = [1, 1]} : vector<16x128xf32> to vector<16x16xf32>
    %71 = vector.extract_strided_slice %53 {offsets = [0, 96], sizes = [16, 32], strides = [1, 1]} : vector<16x128xf32> to vector<16x32xf32>
    %cst_28 = arith.constant dense<0.000000e+00> : vector<16x16xf32>
    %72 = tpu.matmul %69, %70, %cst_28 {dimension_numbers = #tpu.dot_dimension_numbers<[1], [1], [0], [0], [0, 0, 1, 0], [], []>} : vector<16x16xf32>, vector<16x16xf32>, vector<16x16xf32> -> vector<16x16xf32>
    %73 = arith.addf %72, %50 : vector<16x16xf32>
    %cst_29 = arith.constant dense<0xFF800000> : vector<16xf32>
    %74 = vector.multi_reduction <maximumf>, %73, %cst_29 [1] : vector<16x16xf32> to vector<16xf32>
    %75 = vector.shape_cast %74 : vector<16xf32> to vector<16x1xf32>
    %76 = vector.broadcast %75 : vector<16x1xf32> to vector<16x16xf32>
    %77 = arith.subf %73, %76 : vector<16x16xf32>
    %78 = math.exp %77 : vector<16x16xf32>
    %cst_30 = arith.constant dense<0.000000e+00> : vector<16xf32>
    %79 = vector.multi_reduction <add>, %78, %cst_30 [1] : vector<16x16xf32> to vector<16xf32>
    %80 = vector.shape_cast %79 : vector<16xf32> to vector<16x1xf32>
    %81 = vector.broadcast %80 : vector<16x1xf32> to vector<16x16xf32>
    %82 = arith.divf %78, %81 : vector<16x16xf32>
    %cst_31 = arith.constant dense<0.000000e+00> : vector<16x32xf32>
    %83 = tpu.matmul %82, %71, %cst_31 {dimension_numbers = #tpu.dot_dimension_numbers<[1], [0], [0], [1], [0, 0, 1, 1], [], []>} : vector<16x16xf32>, vector<16x32xf32>, vector<16x32xf32> -> vector<16x32xf32>
    %84 = arith.addf %68, %83 : vector<16x32xf32>
    %85 = arith.addf %1, %84 : vector<16x32xf32>
    %cst_32 = arith.constant dense<0.000000e+00> : vector<16xf32>
    %86 = vector.multi_reduction <add>, %85, %cst_32 [1] : vector<16x32xf32> to vector<16xf32>
    %87 = vector.shape_cast %86 : vector<16xf32> to vector<16x1xf32>
    %cst_33 = arith.constant 3.200000e+01 : f32
    %88 = vector.broadcast %cst_33 : f32 to vector<16x1xf32>
    %89 = arith.divf %87, %88 : vector<16x1xf32>
    %90 = vector.broadcast %89 : vector<16x1xf32> to vector<16x32xf32>
    %91 = arith.subf %85, %90 : vector<16x32xf32>
    %92 = arith.mulf %91, %91 : vector<16x32xf32>
    %cst_34 = arith.constant dense<0.000000e+00> : vector<16xf32>
    %93 = vector.multi_reduction <add>, %92, %cst_34 [1] : vector<16x32xf32> to vector<16xf32>
    %94 = vector.shape_cast %93 : vector<16xf32> to vector<16x1xf32>
    %cst_35 = arith.constant 3.200000e+01 : f32
    %95 = vector.broadcast %cst_35 : f32 to vector<16x1xf32>
    %96 = arith.divf %94, %95 : vector<16x1xf32>
    %cst_36 = arith.constant 9.99999974E-6 : f32
    %97 = vector.broadcast %cst_36 : f32 to vector<16x1xf32>
    %98 = arith.addf %96, %97 : vector<16x1xf32>
    %99 = math.rsqrt %98 : vector<16x1xf32>
    %100 = vector.broadcast %99 : vector<16x1xf32> to vector<16x32xf32>
    %101 = arith.mulf %91, %100 : vector<16x32xf32>
    %102 = vector.broadcast %6 : vector<1x32xf32> to vector<16x32xf32>
    %103 = arith.mulf %101, %102 : vector<16x32xf32>
    %104 = vector.broadcast %7 : vector<1x32xf32> to vector<16x32xf32>
    %105 = arith.addf %103, %104 : vector<16x32xf32>
    %cst_37 = arith.constant dense<0.000000e+00> : vector<16x64xf32>
    %106 = tpu.matmul %105, %3, %cst_37 {dimension_numbers = #tpu.dot_dimension_numbers<[1], [0], [0], [1], [0, 0, 1, 1], [], []>} : vector<16x32xf32>, vector<32x64xf32>, vector<16x64xf32> -> vector<16x64xf32>
    %107 = vector.broadcast %8 : vector<1x64xf32> to vector<16x64xf32>
    %108 = arith.addf %106, %107 : vector<16x64xf32>
    %cst_38 = arith.constant 0.000000e+00 : f32
    %109 = vector.broadcast %cst_38 : f32 to vector<16x64xf32>
    %110 = arith.maximumf %108, %109 : vector<16x64xf32>
    %cst_39 = arith.constant dense<0.000000e+00> : vector<16x32xf32>
    %111 = tpu.matmul %110, %4, %cst_39 {dimension_numbers = #tpu.dot_dimension_numbers<[1], [0], [0], [1], [0, 0, 1, 1], [], []>} : vector<16x64xf32>, vector<64x32xf32>, vector<16x32xf32> -> vector<16x32xf32>
    %112 = vector.broadcast %9 : vector<1x32xf32> to vector<16x32xf32>
    %113 = arith.addf %111, %112 : vector<16x32xf32>
    %114 = arith.addf %105, %113 : vector<16x32xf32>
    %cst_40 = arith.constant dense<0.000000e+00> : vector<16xf32>
    %115 = vector.multi_reduction <add>, %114, %cst_40 [1] : vector<16x32xf32> to vector<16xf32>
    %116 = vector.shape_cast %115 : vector<16xf32> to vector<16x1xf32>
    %cst_41 = arith.constant 3.200000e+01 : f32
    %117 = vector.broadcast %cst_41 : f32 to vector<16x1xf32>
    %118 = arith.divf %116, %117 : vector<16x1xf32>
    %119 = vector.broadcast %118 : vector<16x1xf32> to vector<16x32xf32>
    %120 = arith.subf %114, %119 : vector<16x32xf32>
    %121 = arith.mulf %120, %120 : vector<16x32xf32>
    %cst_42 = arith.constant dense<0.000000e+00> : vector<16xf32>
    %122 = vector.multi_reduction <add>, %121, %cst_42 [1] : vector<16x32xf32> to vector<16xf32>
    %123 = vector.shape_cast %122 : vector<16xf32> to vector<16x1xf32>
    %cst_43 = arith.constant 3.200000e+01 : f32
    %124 = vector.broadcast %cst_43 : f32 to vector<16x1xf32>
    %125 = arith.divf %123, %124 : vector<16x1xf32>
    %cst_44 = arith.constant 9.99999974E-6 : f32
    %126 = vector.broadcast %cst_44 : f32 to vector<16x1xf32>
    %127 = arith.addf %125, %126 : vector<16x1xf32>
    %128 = math.rsqrt %127 : vector<16x1xf32>
    %129 = vector.broadcast %128 : vector<16x1xf32> to vector<16x32xf32>
    %130 = arith.mulf %120, %129 : vector<16x32xf32>
    %131 = vector.broadcast %10 : vector<1x32xf32> to vector<16x32xf32>
    %132 = arith.mulf %130, %131 : vector<16x32xf32>
    %133 = vector.broadcast %11 : vector<1x32xf32> to vector<16x32xf32>
    %134 = arith.addf %132, %133 : vector<16x32xf32>
    %cst_45 = arith.constant 0.000000e+00 : f32
    %135 = vector.broadcast %cst_45 : f32 to vector<16x32xf32>
    %136 = arith.maximumf %134, %135 : vector<16x32xf32>
    %cst_46 = arith.constant dense<0.000000e+00> : vector<16x128xf32>
    %137 = tpu.matmul %136, %2, %cst_46 {dimension_numbers = #tpu.dot_dimension_numbers<[1], [0], [0], [1], [0, 0, 1, 1], [], []>} : vector<16x32xf32>, vector<32x128xf32>, vector<16x128xf32> -> vector<16x128xf32>
    %138 = vector.broadcast %5 : vector<1x128xf32> to vector<16x128xf32>
    %139 = arith.addf %137, %138 : vector<16x128xf32>
    %140 = vector.extract_strided_slice %139 {offsets = [0, 0], sizes = [16, 16], strides = [1, 1]} : vector<16x128xf32> to vector<16x16xf32>
    %141 = vector.extract_strided_slice %139 {offsets = [0, 32], sizes = [16, 16], strides = [1, 1]} : vector<16x128xf32> to vector<16x16xf32>
    %142 = vector.extract_strided_slice %139 {offsets = [0, 64], sizes = [16, 32], strides = [1, 1]} : vector<16x128xf32> to vector<16x32xf32>
    %cst_47 = arith.constant dense<0.000000e+00> : vector<16x16xf32>
    %143 = tpu.matmul %140, %141, %cst_47 {dimension_numbers = #tpu.dot_dimension_numbers<[1], [1], [0], [0], [0, 0, 1, 0], [], []>} : vector<16x16xf32>, vector<16x16xf32>, vector<16x16xf32> -> vector<16x16xf32>
    %144 = arith.addf %143, %50 : vector<16x16xf32>
    %cst_48 = arith.constant dense<0xFF800000> : vector<16xf32>
    %145 = vector.multi_reduction <maximumf>, %144, %cst_48 [1] : vector<16x16xf32> to vector<16xf32>
    %146 = vector.shape_cast %145 : vector<16xf32> to vector<16x1xf32>
    %147 = vector.broadcast %146 : vector<16x1xf32> to vector<16x16xf32>
    %148 = arith.subf %144, %147 : vector<16x16xf32>
    %149 = math.exp %148 : vector<16x16xf32>
    %cst_49 = arith.constant dense<0.000000e+00> : vector<16xf32>
    %150 = vector.multi_reduction <add>, %149, %cst_49 [1] : vector<16x16xf32> to vector<16xf32>
    %151 = vector.shape_cast %150 : vector<16xf32> to vector<16x1xf32>
    %152 = vector.broadcast %151 : vector<16x1xf32> to vector<16x16xf32>
    %153 = arith.divf %149, %152 : vector<16x16xf32>
    %cst_50 = arith.constant dense<0.000000e+00> : vector<16x32xf32>
    %154 = tpu.matmul %153, %142, %cst_50 {dimension_numbers = #tpu.dot_dimension_numbers<[1], [0], [0], [1], [0, 0, 1, 1], [], []>} : vector<16x16xf32>, vector<16x32xf32>, vector<16x32xf32> -> vector<16x32xf32>
    %155 = vector.extract_strided_slice %139 {offsets = [0, 16], sizes = [16, 16], strides = [1, 1]} : vector<16x128xf32> to vector<16x16xf32>
    %156 = vector.extract_strided_slice %139 {offsets = [0, 48], sizes = [16, 16], strides = [1, 1]} : vector<16x128xf32> to vector<16x16xf32>
    %157 = vector.extract_strided_slice %139 {offsets = [0, 96], sizes = [16, 32], strides = [1, 1]} : vector<16x128xf32> to vector<16x32xf32>
    %cst_51 = arith.constant dense<0.000000e+00> : vector<16x16xf32>
    %158 = tpu.matmul %155, %156, %cst_51 {dimension_numbers = #tpu.dot_dimension_numbers<[1], [1], [0], [0], [0, 0, 1, 0], [], []>} : vector<16x16xf32>, vector<16x16xf32>, vector<16x16xf32> -> vector<16x16xf32>
    %159 = arith.addf %158, %50 : vector<16x16xf32>
    %cst_52 = arith.constant dense<0xFF800000> : vector<16xf32>
    %160 = vector.multi_reduction <maximumf>, %159, %cst_52 [1] : vector<16x16xf32> to vector<16xf32>
    %161 = vector.shape_cast %160 : vector<16xf32> to vector<16x1xf32>
    %162 = vector.broadcast %161 : vector<16x1xf32> to vector<16x16xf32>
    %163 = arith.subf %159, %162 : vector<16x16xf32>
    %164 = math.exp %163 : vector<16x16xf32>
    %cst_53 = arith.constant dense<0.000000e+00> : vector<16xf32>
    %165 = vector.multi_reduction <add>, %164, %cst_53 [1] : vector<16x16xf32> to vector<16xf32>
    %166 = vector.shape_cast %165 : vector<16xf32> to vector<16x1xf32>
    %167 = vector.broadcast %166 : vector<16x1xf32> to vector<16x16xf32>
    %168 = arith.divf %164, %167 : vector<16x16xf32>
    %cst_54 = arith.constant dense<0.000000e+00> : vector<16x32xf32>
    %169 = tpu.matmul %168, %157, %cst_54 {dimension_numbers = #tpu.dot_dimension_numbers<[1], [0], [0], [1], [0, 0, 1, 1], [], []>} : vector<16x16xf32>, vector<16x32xf32>, vector<16x32xf32> -> vector<16x32xf32>
    %170 = arith.addf %154, %169 : vector<16x32xf32>
    %171 = arith.addf %136, %170 : vector<16x32xf32>
    %cst_55 = arith.constant dense<0.000000e+00> : vector<16xf32>
    %172 = vector.multi_reduction <add>, %171, %cst_55 [1] : vector<16x32xf32> to vector<16xf32>
    %173 = vector.shape_cast %172 : vector<16xf32> to vector<16x1xf32>
    %cst_56 = arith.constant 3.200000e+01 : f32
    %174 = vector.broadcast %cst_56 : f32 to vector<16x1xf32>
    %175 = arith.divf %173, %174 : vector<16x1xf32>
    %176 = vector.broadcast %175 : vector<16x1xf32> to vector<16x32xf32>
    %177 = arith.subf %171, %176 : vector<16x32xf32>
    %178 = arith.mulf %177, %177 : vector<16x32xf32>
    %cst_57 = arith.constant dense<0.000000e+00> : vector<16xf32>
    %179 = vector.multi_reduction <add>, %178, %cst_57 [1] : vector<16x32xf32> to vector<16xf32>
    %180 = vector.shape_cast %179 : vector<16xf32> to vector<16x1xf32>
    %cst_58 = arith.constant 3.200000e+01 : f32
    %181 = vector.broadcast %cst_58 : f32 to vector<16x1xf32>
    %182 = arith.divf %180, %181 : vector<16x1xf32>
    %cst_59 = arith.constant 9.99999974E-6 : f32
    %183 = vector.broadcast %cst_59 : f32 to vector<16x1xf32>
    %184 = arith.addf %182, %183 : vector<16x1xf32>
    %185 = math.rsqrt %184 : vector<16x1xf32>
    %186 = vector.broadcast %185 : vector<16x1xf32> to vector<16x32xf32>
    %187 = arith.mulf %177, %186 : vector<16x32xf32>
    %188 = vector.broadcast %6 : vector<1x32xf32> to vector<16x32xf32>
    %189 = arith.mulf %187, %188 : vector<16x32xf32>
    %190 = vector.broadcast %7 : vector<1x32xf32> to vector<16x32xf32>
    %191 = arith.addf %189, %190 : vector<16x32xf32>
    %cst_60 = arith.constant dense<0.000000e+00> : vector<16x64xf32>
    %192 = tpu.matmul %191, %3, %cst_60 {dimension_numbers = #tpu.dot_dimension_numbers<[1], [0], [0], [1], [0, 0, 1, 1], [], []>} : vector<16x32xf32>, vector<32x64xf32>, vector<16x64xf32> -> vector<16x64xf32>
    %193 = vector.broadcast %8 : vector<1x64xf32> to vector<16x64xf32>
    %194 = arith.addf %192, %193 : vector<16x64xf32>
    %cst_61 = arith.constant 0.000000e+00 : f32
    %195 = vector.broadcast %cst_61 : f32 to vector<16x64xf32>
    %196 = arith.maximumf %194, %195 : vector<16x64xf32>
    %cst_62 = arith.constant dense<0.000000e+00> : vector<16x32xf32>
    %197 = tpu.matmul %196, %4, %cst_62 {dimension_numbers = #tpu.dot_dimension_numbers<[1], [0], [0], [1], [0, 0, 1, 1], [], []>} : vector<16x64xf32>, vector<64x32xf32>, vector<16x32xf32> -> vector<16x32xf32>
    %198 = vector.broadcast %9 : vector<1x32xf32> to vector<16x32xf32>
    %199 = arith.addf %197, %198 : vector<16x32xf32>
    %200 = arith.addf %191, %199 : vector<16x32xf32>
    %cst_63 = arith.constant dense<0.000000e+00> : vector<16xf32>
    %201 = vector.multi_reduction <add>, %200, %cst_63 [1] : vector<16x32xf32> to vector<16xf32>
    %202 = vector.shape_cast %201 : vector<16xf32> to vector<16x1xf32>
    %cst_64 = arith.constant 3.200000e+01 : f32
    %203 = vector.broadcast %cst_64 : f32 to vector<16x1xf32>
    %204 = arith.divf %202, %203 : vector<16x1xf32>
    %205 = vector.broadcast %204 : vector<16x1xf32> to vector<16x32xf32>
    %206 = arith.subf %200, %205 : vector<16x32xf32>
    %207 = arith.mulf %206, %206 : vector<16x32xf32>
    %cst_65 = arith.constant dense<0.000000e+00> : vector<16xf32>
    %208 = vector.multi_reduction <add>, %207, %cst_65 [1] : vector<16x32xf32> to vector<16xf32>
    %209 = vector.shape_cast %208 : vector<16xf32> to vector<16x1xf32>
    %cst_66 = arith.constant 3.200000e+01 : f32
    %210 = vector.broadcast %cst_66 : f32 to vector<16x1xf32>
    %211 = arith.divf %209, %210 : vector<16x1xf32>
    %cst_67 = arith.constant 9.99999974E-6 : f32
    %212 = vector.broadcast %cst_67 : f32 to vector<16x1xf32>
    %213 = arith.addf %211, %212 : vector<16x1xf32>
    %214 = math.rsqrt %213 : vector<16x1xf32>
    %215 = vector.broadcast %214 : vector<16x1xf32> to vector<16x32xf32>
    %216 = arith.mulf %206, %215 : vector<16x32xf32>
    %217 = vector.broadcast %10 : vector<1x32xf32> to vector<16x32xf32>
    %218 = arith.mulf %216, %217 : vector<16x32xf32>
    %219 = vector.broadcast %11 : vector<1x32xf32> to vector<16x32xf32>
    %220 = arith.addf %218, %219 : vector<16x32xf32>
    %cst_68 = arith.constant 0.000000e+00 : f32
    %221 = vector.broadcast %cst_68 : f32 to vector<16x32xf32>
    %222 = arith.maximumf %220, %221 : vector<16x32xf32>
    %c128 = arith.constant 128 : index
    %c0_69 = arith.constant 0 : index
    %223 = vector.load %arg2[%c128, %c0_69] : memref<160x128xf32, #tpu.memory_space<vmem>>, vector<32x1xf32>
    %c7 = arith.constant 7 : index
    %c0_70 = arith.constant 0 : index
    %224 = vector.load %arg3[%c7, %c0_70] : memref<8x128xf32, #tpu.memory_space<vmem>>, vector<1x1xf32>
    %cst_71 = arith.constant dense<0.000000e+00> : vector<16x1xf32>
    %225 = tpu.matmul %222, %223, %cst_71 {dimension_numbers = #tpu.dot_dimension_numbers<[1], [0], [0], [1], [0, 0, 1, 1], [], []>} : vector<16x32xf32>, vector<32x1xf32>, vector<16x1xf32> -> vector<16x1xf32>
    %226 = vector.broadcast %224 : vector<1x1xf32> to vector<16x1xf32>
    %227 = arith.addf %225, %226 : vector<16x1xf32>
    %cst_72 = arith.constant 0.000000e+00 : f32
    %228 = vector.broadcast %cst_72 : f32 to vector<16x1xf32>
    %229 = arith.subf %228, %227 : vector<16x1xf32>
    %230 = math.exp %229 : vector<16x1xf32>
    %cst_73 = arith.constant 1.000000e+00 : f32
    %231 = vector.broadcast %cst_73 : f32 to vector<16x1xf32>
    %232 = arith.addf %231, %230 : vector<16x1xf32>
    %cst_74 = arith.constant 1.000000e+00 : f32
    %233 = vector.broadcast %cst_74 : f32 to vector<16x1xf32>
    %234 = arith.divf %233, %232 : vector<16x1xf32>
    %235 = vector.shape_cast %234 : vector<16x1xf32> to vector<16x1xf32>
    %236 = vector.broadcast %235 : vector<16x1xf32> to vector<16x128xf32>
    %c0_75 = arith.constant 0 : index
    %c0_76 = arith.constant 0 : index
    %c0_77 = arith.constant 0 : index
    %237 = vector.load %arg4[%c0_75, %c0_76, %c0_77] : memref<1x16x128xf32, #tpu.memory_space<vmem>>, vector<1x16x128xf32>
    %238 = vector.shape_cast %237 : vector<1x16x128xf32> to vector<16x128xf32>
    %239 = vector.shape_cast %236 : vector<16x128xf32> to vector<1x16x128xf32>
    tpu.vector_store %arg4[%c0_75, %c0_76, %c0_77], %239 {strides = array<i32>} : memref<1x16x128xf32, #tpu.memory_space<vmem>>, vector<1x16x128xf32>,
    return
  }
  func.func @transform_0(%arg0: i32) -> (i32, i32, i32) {
    %c0_i32 = arith.constant 0 : i32
    %c0_i32_0 = arith.constant 0 : i32
    %c0_i32_1 = arith.constant 0 : i32
    return %arg0, %c0_i32, %c0_i32_0 : i32, i32, i32
  }
  func.func @transform_1(%arg0: i32) -> (i32, i32) {
    %c0_i32 = arith.constant 0 : i32
    %c0_i32_0 = arith.constant 0 : i32
    %c0_i32_1 = arith.constant 0 : i32
    return %c0_i32, %c0_i32_0 : i32, i32
  }
  func.func @transform_2(%arg0: i32) -> (i32, i32) {
    %c0_i32 = arith.constant 0 : i32
    %c0_i32_0 = arith.constant 0 : i32
    %c0_i32_1 = arith.constant 0 : i32
    return %c0_i32, %c0_i32_0 : i32, i32
  }
  func.func @transform_3(%arg0: i32) -> (i32, i32, i32) {
    %c0_i32 = arith.constant 0 : i32
    %c0_i32_0 = arith.constant 0 : i32
    %c0_i32_1 = arith.constant 0 : i32
    return %arg0, %c0_i32, %c0_i32_0 : i32, i32, i32
  }
}

</mosaic_0001>

<llo_original>
// kernel: tfm_forward.1
$region0: #{tfm_forward.1}
  #allocation0 [shape = 'u32[]', space=smem, size = 0x4, offset = 0x4, fixed_abs, tag = 'smem constant byte address 0x4 - core index']
  #allocation1 [shape = 'u32[144,128]{1,0:T(1,128)}', space=vmem, size = 0x12000, scoped, tag = 'internal scratch']
  %s0 = inlined_call_operand.hbm [shape: f32[4,16,32], index: 0, kind: input, shape index: {}]
  %s1 = inlined_call_operand.hbm [shape: f32[160,128], index: 1, kind: input, shape index: {}]
  %s2 = inlined_call_operand.hbm [shape: f32[8,128], index: 2, kind: input, shape index: {}]
  %s3 = inlined_call_operand.vmem [shape: f32[4,16,128], index: 3, kind: output, shape index: {}]
  %s4 = sld [smem:[#allocation0]]
  $region57: #{tfm_forward.1} parent=0
    _
  %s6 = ssub.s32 1, %s4
  %s7 = scalar_select 0, %s6, %s4
  $region1: #{tfm_forward.1} parent=0
    #allocation2 [shape = 'u8[16384]{0}', space=vmem, size = 0x4000, scoped, tag = 'input window, operand 0']
    #allocation3 [shape = 's32[2]{0}', space=sflag, size = 0x8, scoped, tag = 'scoped memory for tfm_forward.1']
    #allocation4 [shape = 'u8[81920]{0}', space=vmem, size = 0x14000, scoped, tag = 'input window, operand 1, single buffered']
    #allocation5 [shape = 's32[1]{0}', space=sflag, size = 0x4, scoped, tag = 'scoped memory for tfm_forward.1']
    #allocation6 [shape = 'u8[4096]{0}', space=vmem, size = 0x1000, scoped, tag = 'input window, operand 2, single buffered']
    %8 = vsyncpa [#allocation3], 0
    %s9 = scalar_lea.sflag [#allocation3], 1
    %10 = vsyncpa %s9, 0
    %11 = vsyncpa [#allocation5], 0
    loop: start=0, step=1, limit=6
    $region2: #{tfm_forward.1} parent=1 // loop_pre_header
      _
    $region3: #{tfm_forward.1} parent=1 // loop_header
      %s13 = sphi 0, %s17
      %p14 = scmp.ge.s32.totalorder %s13, 6
      %s23 = sphi 0, %s25
      %s26 = sphi 0, %s23
      %s27 = sphi 0, %s26
      %s43 = sphi 0, %s27
      %s47 = sphi 0, %s47
      %s49 = sphi 0, %s47
      %s50 = sphi 0, %s49
      %s64 = sphi 0, %s50
      %s68 = sphi 0, %s68
      %s70 = sphi 0, %s68
      %s71 = sphi 0, %s70
      %s85 = sphi 0, %s71
      %s91 = sphi 0, %s93
      %s94 = sphi 0, %s91
      %s95 = sphi 0, %s94
      %s111 = sphi 0, %s95
    $region4: #{tfm_forward.1} parent=1 // loop_header_branch
      %16 = sbr.rel (%p14) target = $region8
    $region5: #{tfm_forward.1} parent=1 // loop_body
      %s18 = ssub.s32 %s13, 1
      %s19 = ssub.s32 %s13, 2
      %s20 = sadd.s32 %s13, 1
      %s21 = ssub.s32 %s13, %s20
      %p22 = scmp.eq.s32.totalorder %s21, 0
      %s24 = sadd.s32 %s23, 1
      %s25 = scalar_select %p22, %s23, %s24
      %p28 = pneg %p22
      %p29 = scmp.eq.s32.totalorder %s13, 3
      %p30 = por %p28, %p29
      %p31 = scmp.ne.s32.totalorder %s23, %s26
      %p32 = scmp.eq.s32.totalorder %s13, 0
      %p33 = por %p31, %p32
      %p34 = scmp.ne.s32.totalorder %s23, %s26
      %p35 = scmp.eq.s32.totalorder %s18, 3
      %p36 = por %p34, %p35
      %p37 = scmp.ne.s32.totalorder %s26, %s27
      %p38 = scmp.eq.s32.totalorder %s18, 0
      %p39 = por %p37, %p38
      %p40 = scmp.ne.s32.totalorder %s26, %s27
      %p41 = scmp.eq.s32.totalorder %s19, 3
      %p42 = por %p40, %p41
      %p44 = scmp.ne.s32.totalorder %s27, %s43
      %p45 = scmp.eq.s32.totalorder %s19, 0
      %p46 = por %p44, %p45
      %s48 = sadd.s32 %s47, 1
      %p51 = scmp.eq.s32.totalorder %s13, 3
      %p52 = scmp.ne.s32.totalorder %s47, %s49
      %p53 = scmp.eq.s32.totalorder %s13, 0
      %p54 = por %p52, %p53
      %p55 = scmp.ne.s32.totalorder %s47, %s49
      %p56 = scmp.eq.s32.totalorder %s18, 3
      %p57 = por %p55, %p56
      %p58 = scmp.ne.s32.totalorder %s49, %s50
      %p59 = scmp.eq.s32.totalorder %s18, 0
      %p60 = por %p58, %p59
      %p61 = scmp.ne.s32.totalorder %s49, %s50
      %p62 = scmp.eq.s32.totalorder %s19, 3
      %p63 = por %p61, %p62
      %p65 = scmp.ne.s32.totalorder %s50, %s64
      %p66 = scmp.eq.s32.totalorder %s19, 0
      %p67 = por %p65, %p66
      %s69 = sadd.s32 %s68, 1
      %p72 = scmp.eq.s32.totalorder %s13, 3
      %p73 = scmp.ne.s32.totalorder %s68, %s70
      %p74 = scmp.eq.s32.totalorder %s13, 0
      %p75 = por %p73, %p74
      %p76 = scmp.ne.s32.totalorder %s68, %s70
      %p77 = scmp.eq.s32.totalorder %s18, 3
      %p78 = por %p76, %p77
      %p79 = scmp.ne.s32.totalorder %s70, %s71
      %p80 = scmp.eq.s32.totalorder %s18, 0
      %p81 = por %p79, %p80
      %p82 = scmp.ne.s32.totalorder %s70, %s71
      %p83 = scmp.eq.s32.totalorder %s19, 3
      %p84 = por %p82, %p83
      %p86 = scmp.ne.s32.totalorder %s71, %s85
      %p87 = scmp.eq.s32.totalorder %s19, 0
      %p88 = por %p86, %p87
      %s89 = ssub.s32 %s13, %s20
      %p90 = scmp.eq.s32.totalorder %s89, 0
      %s92 = sadd.s32 %s91, 1
      %s93 = scalar_select %p90, %s91, %s92
      %p96 = pneg %p90
      %p97 = scmp.eq.s32.totalorder %s13, 3
      %p98 = por %p96, %p97
      %p99 = scmp.ne.s32.totalorder %s91, %s94
      %p100 = scmp.eq.s32.totalorder %s13, 0
      %p101 = por %p99, %p100
      %p102 = scmp.ne.s32.totalorder %s91, %s94
      %p103 = scmp.eq.s32.totalorder %s18, 3
      %p104 = por %p102, %p103
      %p105 = scmp.ne.s32.totalorder %s94, %s95
      %p106 = scmp.eq.s32.totalorder %s18, 0
      %p107 = por %p105, %p106
      %p108 = scmp.ne.s32.totalorder %s94, %s95
      %p109 = scmp.eq.s32.totalorder %s19, 3
      %p110 = por %p108, %p109
      %p112 = scmp.ne.s32.totalorder %s95, %s111
      %p113 = scmp.eq.s32.totalorder %s19, 0
      %p114 = por %p112, %p113
      %p115 = scmp.le.s32.totalorder 1, %s13
      %p116 = scmp.lt.s32.totalorder %s13, 5
      %p117 = pnand %p115, %p116
      %p118 = pneg %p117
      // Predicated region
      $region9: #{tfm_forward.1} parent=5 // pred_check
        _
      $region10: #{tfm_forward.1} parent=5 // pred_check_branch
        %120 = sbr.rel (%p117) target = $region12
      $region11: #{tfm_forward.1} parent=5 // pred_region
        %s121 = ssub.s32 %s13, 1
        // Predicated region
        $region13: #{tfm_forward.1} parent=11 // pred_check
          %p122 = pneg %p60
        $region14: #{tfm_forward.1} parent=11 // pred_check_branch
          %124 = sbr.rel (%p122) target = $region16
        $region15: #{tfm_forward.1} parent=11 // pred_region
          %s126 = ssub.s32 2560, 2560
          %127 = vsyncadd [#allocation5], %s126
          %s128 = sshll.u32 [#allocation4], 4
          %s129 = int_to_ptr.vmem [resolvable:$true] %s128
          %134 = dma.hbm_to_vmem [thread:$0]  %s1, 2560, %s129, [#allocation5], 128, 128, 8
        $region16: #{tfm_forward.1} parent=11 // pred_fallthru
          _
        // Predicated region
        $region17: #{tfm_forward.1} parent=11 // pred_check
          %p135 = pneg %p81
        $region18: #{tfm_forward.1} parent=11 // pred_check_branch
          %137 = sbr.rel (%p135) target = $region20
        $region19: #{tfm_forward.1} parent=11 // pred_region
          %s139 = ssub.s32 128, 128
          %140 = vsyncadd [#allocation5], %s139
          %s142 = sshll.u32 [#allocation6], 4
          %s143 = int_to_ptr.vmem [resolvable:$true] %s142
          %145 = dma.hbm_to_vmem [thread:$0]  %s2, 128, %s143, [#allocation5]
        $region20: #{tfm_forward.1} parent=11 // pred_fallthru
          _
      $region12: #{tfm_forward.1} parent=5 // pred_fallthru
        _
      %p146 = scmp.lt.s32.totalorder %s13, 4
      // Predicated region
      $region21: #{tfm_forward.1} parent=5 // pred_check
        %p147 = pneg %p146
      $region22: #{tfm_forward.1} parent=5 // pred_check_branch
        %149 = sbr.rel (%p147) target = $region24
      $region23: #{tfm_forward.1} parent=5 // pred_region
        // Predicated region
        $region25: #{tfm_forward.1} parent=23 // pred_check
          %p150 = pneg %p33
        $region26: #{tfm_forward.1} parent=23 // pred_check_branch
          %152 = sbr.rel (%p150) target = $region28
        $region27: #{tfm_forward.1} parent=23 // pred_region
          %s153 = sand.u32 %s23, 1
          %s154 = scalar_lea.sflag [#allocation3], %s153
          %s155 = sand.u32 %s23, 1
          %s156 = smul.addr %s155, 16
          %s157 = scalar_lea.vmem [#allocation2], %s156
          %s159 = ssub.s32 256, 256
          %160 = vsyncadd %s154, %s159
          %s161 = smul.addr %s13, 2
          %s162 = smul.addr %s161, 128
          %s163 = scalar_lea.hbm %s0, %s162
          %s164 = sshll.u32 %s157, 4
          %s165 = int_to_ptr.vmem [resolvable:$true] %s164
          %170 = dma.hbm_to_vmem [thread:$0]  %s163, 256, %s165, %s154, 128, 128, 8
        $region28: #{tfm_forward.1} parent=23 // pred_fallthru
          _
      $region24: #{tfm_forward.1} parent=5 // pred_fallthru
        _
      %p171 = scmp.le.s32.totalorder 1, %s13
      %p172 = scmp.lt.s32.totalorder %s13, 5
      %p173 = pnand %p171, %p172
      %p174 = pneg %p173
      // Predicated region
      $region29: #{tfm_forward.1} parent=5 // pred_check
        _
      $region30: #{tfm_forward.1} parent=5 // pred_check_branch
        %176 = sbr.rel (%p173) target = $region32
      $region31: #{tfm_forward.1} parent=5 // pred_region
        %s177 = ssub.s32 %s13, 1
        %s178 = sand.u32 %s26, 1
        %s179 = scalar_lea.sflag [#allocation3], %s178
        %s180 = sand.u32 %s26, 1
        %s181 = smul.addr %s180, 16
        %s182 = scalar_lea.vmem [#allocation2], %s181
        // Predicated region
        $region33: #{tfm_forward.1} parent=31 // pred_check
          %p183 = pneg %p39
        $region34: #{tfm_forward.1} parent=31 // pred_check_branch
          %185 = sbr.rel (%p183) target = $region36
        $region35: #{tfm_forward.1} parent=31 // pred_region
          %186 = dma.done %s179, 256
        $region36: #{tfm_forward.1} parent=31 // pred_fallthru
          _
        // Predicated region
        $region37: #{tfm_forward.1} parent=31 // pred_check
          %p187 = pneg %p60
        $region38: #{tfm_forward.1} parent=31 // pred_check_branch
          %189 = sbr.rel (%p187) target = $region40
        $region39: #{tfm_forward.1} parent=31 // pred_region
          %190 = dma.done [#allocation5], 2560
        $region40: #{tfm_forward.1} parent=31 // pred_fallthru
          _
        // Predicated region
        $region41: #{tfm_forward.1} parent=31 // pred_check
          %p191 = pneg %p81
        $region42: #{tfm_forward.1} parent=31 // pred_check_branch
          %193 = sbr.rel (%p191) target = $region44
        $region43: #{tfm_forward.1} parent=31 // pred_region
          %194 = dma.done [#allocation5], 128
        $region44: #{tfm_forward.1} parent=31 // pred_fallthru
          _
        %s195 = sand.u32 %s26, 1
        %s196 = scalar_lea.sflag [#allocation3], %s195
        %s197 = sand.u32 %s26, 1
        %s198 = smul.addr %s197, 16
        %s199 = scalar_lea.vmem [#allocation2], %s198
        %p200 = pneg %p39
        %p201 = pneg %p36
        %p202 = pneg %p60
        %p203 = pneg %p57
        %p204 = pneg %p81
        %p205 = pneg %p78
        %p206 = pneg %p107
        %p207 = pneg %p104
        %p208 = scmp.lt.s32.totalorder %s18, 3
        %s209 = scalar_select %p208, %s18, 3
        %s210 = smul.addr %s209, 2
        %s211 = smul.addr %s210, 8
        %s212 = scalar_lea.vmem %s3, %s211
        %p213 = scmp.lt.s32.totalorder %s18, 3
        %s214 = scalar_select %p213, %s18, 3
        %s215 = smul.addr %s214, 2
        %s216 = smul.addr %s215, 8
        %s217 = scalar_lea.vmem %s3, %s216
        %v218 = vld [vmem:[%s182] sm:$0xff]
        %v219 = vld [vmem:[%s182 + $0x8] sm:$0xff]
        %v220 = vld [vmem:[#allocation4] sm:$0xff]
        %v221 = vld [vmem:[#allocation4 + $0x8] sm:$0xff]
        %v222 = vld [vmem:[#allocation4 + $0x10] sm:$0xff]
        %v223 = vld [vmem:[#allocation4 + $0x18] sm:$0xff]
        %v224 = vld [vmem:[#allocation4 + $0x20] sm:$0xff]
        %v225 = vld [vmem:[#allocation4 + $0x28] sm:$0xff]
        %v226 = vld [vmem:[#allocation4 + $0x30] sm:$0xff]
        %v227 = vld [vmem:[#allocation4 + $0x38] sm:$0xff]
        %v228 = vld [vmem:[#allocation4 + $0x40] sm:$0xff]
        %v229 = vld [vmem:[#allocation4 + $0x48] sm:$0xff]
        %v230 = vld [vmem:[#allocation4 + $0x50] sm:$0xff]
        %v231 = vld [vmem:[#allocation4 + $0x58] sm:$0xff]
        %v232 = vld [vmem:[#allocation4 + $0x60] sm:$0xff]
        %v233 = vld [vmem:[#allocation4 + $0x68] sm:$0xff]
        %v234 = vld [vmem:[#allocation4 + $0x70] sm:$0xff]
        %v235 = vld [vmem:[#allocation4 + $0x78] sm:$0xff]
        %v236 = vld [vmem:[#allocation6] sm:$0x1]
        %v237 = vld [vmem:[#allocation6 + $0x1] sm:$0x1]
        %v238 = vld [vmem:[#allocation6 + $0x2] sm:$0x1]
        %v239 = vld [vmem:[#allocation6 + $0x3] sm:$0x1]
        %v240 = vld [vmem:[#allocation6 + $0x4] sm:$0x1]
        %v241 = vld [vmem:[#allocation6 + $0x5] sm:$0x1]
        %v242 = vld [vmem:[#allocation6 + $0x6] sm:$0x1]
        %v243 = vlaneseq
        %v244 = vshrl.u32 %v243, 7
        %v245 = vadd.s32 %v244, 8
        %vm246 = vcmp.lt.s32.totalorder %v244, 0
        %v247 = vsub.s32 0, %v244
        %v248 = vsel %vm246, %v247, %v244
        %v249 = vshrl.u32 %v248, 1
        %v250 = vand.u32 %v248, 1
        %v251 = vsub.s32 0, %v250
        %v252 = vsel %vm246, %v251, %v250
        %vm253 = vcmp.lt.s32.totalorder %v245, 0
        %v254 = vsub.s32 0, %v245
        %v255 = vsel %vm253, %v254, %v245
        %v256 = vshrl.u32 %v255, 1
        %v257 = vand.u32 %v255, 1
        %v258 = vsub.s32 0, %v257
        %v259 = vsel %vm253, %v258, %v257
        %vm260 = vcmp.ne.s32.totalorder %v252, 0
        %vm261 = vcmp.ne.s32.totalorder %v259, 0
        %vm262 = vcmp.lt.s32.totalorder %v252, 0
        %vm263 = vcmp.lt.s32.totalorder %v259, 0
        %vm264 = vmand %vm262, %vm260
        %vm265 = vmand %vm263, %vm261
        %v266 = vadd.s32 %v252, 2
        %v267 = vadd.s32 %v259, 2
        %v268 = vsel %vm264, %v266, %v252
        %v269 = vsel %vm265, %v267, %v259
        %v270 = vlaneseq
        %v271 = vand.u32 %v270, 127
        %vm272 = vcmp.lt.s32.totalorder %v271, 0
        %v273 = vsub.s32 0, %v271
        %v274 = vsel %vm272, %v273, %v271
        %v275 = vshrl.u32 %v274, 1
        %v276 = vand.u32 %v274, 1
        %v277 = vsub.s32 0, %v276
        %v278 = vsel %vm272, %v277, %v276
        %vm279 = vcmp.ne.s32.totalorder %v278, 0
        %vm280 = vcmp.lt.s32.totalorder %v278, 0
        %vm281 = vmand %vm280, %vm279
        %v282 = vadd.s32 %v278, 2
        %v283 = vsel %vm281, %v282, %v278
        %vm284 = vcmp.ne.s32.totalorder %v268, %v283
        %vm285 = vcmp.ne.s32.totalorder %v269, %v283
        %v286 = vsel %vm284, 1, 0
        %v287 = vsel %vm285, 1, 0
        %v288 = vcvt.s32.f32 %v286
        %v289 = vcvt.s32.f32 %v287
        %v290 = vmul.f32 %v288, -1e+30
        %v291 = vmul.f32 %v289, -1e+30
        %v292 = vlaneseq
        %v293 = vshrl.u32 %v292, 7
        %v294 = vsub.s32 0, %v293
        %v295 = vrot.slane %v236, %v294
        %vm296 = vcmask 261120
        %v298 = vsel %vm296, %v218, 0
        %v301 = vsel %vm296, %v219, 0
        %303 = vmatprep.subr.mxu0 0.0
        %304 = vmatpush1.msra.mxu0 0.0
        %305 = vmatprep.subr.mxu0 0.0
        %306 = vmatpush1.msra.mxu0 0.0
        %307 = vmatprep.subr.mxu0 0.0
        %308 = vmatpush1.msra.mxu0 0.0
        %309 = vmatprep.subr.mxu0 0.0
        %310 = vmatpush1.msra.mxu0 0.0
        %311 = vmatprep.subr.mxu0 0.0
        %312 = vmatpush1.msra.mxu0 0.0
        %313 = vmatprep.subr.mxu0 0.0
        %314 = vmatpush1.msra.mxu0 0.0
        %315 = vmatprep.subr.mxu0 0.0
        %316 = vmatpush1.msra.mxu0 0.0
        %317 = vmatprep.subr.mxu0 0.0
        %318 = vmatpush1.msra.mxu0 0.0
        %319 = vmatprep.subr.mxu0 0.0
        %320 = vmatpush1.msra.mxu0 0.0
        %321 = vmatprep.subr.mxu0 0.0
        %322 = vmatpush1.msra.mxu0 0.0
        %323 = vmatprep.subr.mxu0 0.0
        %324 = vmatpush1.msra.mxu0 0.0
        %325 = vmatprep.subr.mxu0 0.0
        %326 = vmatpush1.msra.mxu0 0.0
        %327 = vmatprep.subr.mxu0 0.0
        %328 = vmatpush1.msra.mxu0 %v223
        %329 = vmatprep.subr.mxu0 0.0
        %330 = vmatpush1.msra.mxu0 %v222
        %331 = vmatprep.subr.mxu0 0.0
        %332 = vmatpush1.msra.mxu0 %v221
        %333 = vmatprep.subr.mxu0 0.0
        %334 = vmatpush1.msra.mxu0 %v220
        %335 = vmatprep.subr.mxu0 0.0
        %336 = vmatpush2.msra.mxu0 0.0
        %337 = vmatprep.subr.mxu0 0.0
        %338 = vmatpush2.msra.mxu0 0.0
        %339 = vmatprep.subr.mxu0 0.0
        %340 = vmatpush2.msra.mxu0 0.0
        %341 = vmatprep.subr.mxu0 0.0
        %342 = vmatpush2.msra.mxu0 0.0
        %343 = vmatprep.subr.mxu0 0.0
        %344 = vmatpush2.msra.mxu0 0.0
        %345 = vmatprep.subr.mxu0 0.0
        %346 = vmatpush2.msra.mxu0 0.0
        %347 = vmatprep.subr.mxu0 0.0
        %348 = vmatpush2.msra.mxu0 0.0
        %349 = vmatprep.subr.mxu0 0.0
        %350 = vmatpush2.msra.mxu0 0.0
        %351 = vmatprep.subr.mxu0 0.0
        %352 = vmatpush2.msra.mxu0 0.0
        %353 = vmatprep.subr.mxu0 0.0
        %354 = vmatpush2.msra.mxu0 0.0
        %355 = vmatprep.subr.mxu0 0.0
        %356 = vmatpush2.msra.mxu0 0.0
        %357 = vmatprep.subr.mxu0 0.0
        %358 = vmatpush2.msra.mxu0 0.0
        %359 = vmatprep.subr.mxu0 0.0
        %360 = vmatpush2.msra.mxu0 0.0
        %361 = vmatprep.subr.mxu0 0.0
        %362 = vmatpush2.msra.mxu0 0.0
        %363 = vmatprep.subr.mxu0 0.0
        %364 = vmatpush2.msra.mxu0 0.0
        %365 = vmatprep.subr.mxu0 0.0
        %366 = vmatpush2.msra.mxu0 0.0
        %367 = vmatprep.mubr.f32.mxu0 0.0
        %368 = vmatmul.mubr.f32.gmra.mxu0 %v298
        %v369 = vpop.f32.mrf.mxu0
        %v370 = vadd.f32 %v295, %v369
        %v371 = vpop.f32.mrf.mxu0
        %372 = vmatprep.mubr.f32.mxu0 0.0
        %373 = vmatmul.mubr.f32.gmra.mxu0 %v301
        %v374 = vpop.f32.mrf.mxu0
        %v375 = vadd.f32 %v295, %v374
        %v376 = vpop.f32.mrf.mxu0
        %377 = vdwg.mxu0
        %380 = vrot.lane.b32.xlu0 %v370, 96
        %v381 = vpop.permute.xlu0 %380
        %382 = vrot.lane.b32.xlu0 %v375, 96
        %v383 = vpop.permute.xlu0 %382
        %vm384 = vcmask 130048
        %v385 = vsel %vm384, %v370, 0
        %v387 = vsel %vm384, %v375, 0
        %v389 = vsel %vm384, %v381, 0
        %v391 = vsel %vm384, %v383, 0
        %393 = vmatprep.subr.mxu0 0.0
        %394 = vmatpush1.xpose.msra.mxu0 0.0
        %395 = vmatprep.subr.mxu0 0.0
        %396 = vmatpush1.xpose.msra.mxu0 0.0
        %397 = vmatprep.subr.mxu0 0.0
        %398 = vmatpush1.xpose.msra.mxu0 0.0
        %399 = vmatprep.subr.mxu0 0.0
        %400 = vmatpush1.xpose.msra.mxu0 0.0
        %401 = vmatprep.subr.mxu0 0.0
        %402 = vmatpush1.xpose.msra.mxu0 0.0
        %403 = vmatprep.subr.mxu0 0.0
        %404 = vmatpush1.xpose.msra.mxu0 0.0
        %405 = vmatprep.subr.mxu0 0.0
        %406 = vmatpush1.xpose.msra.mxu0 0.0
        %407 = vmatprep.subr.mxu0 0.0
        %408 = vmatpush1.xpose.msra.mxu0 0.0
        %409 = vmatprep.subr.mxu0 0.0
        %410 = vmatpush1.xpose.msra.mxu0 0.0
        %411 = vmatprep.subr.mxu0 0.0
        %412 = vmatpush1.xpose.msra.mxu0 0.0
        %413 = vmatprep.subr.mxu0 0.0
        %414 = vmatpush1.xpose.msra.mxu0 0.0
        %415 = vmatprep.subr.mxu0 0.0
        %416 = vmatpush1.xpose.msra.mxu0 0.0
        %417 = vmatprep.subr.mxu0 0.0
        %418 = vmatpush1.xpose.msra.mxu0 0.0
        %419 = vmatprep.subr.mxu0 0.0
        %420 = vmatpush1.xpose.msra.mxu0 0.0
        %421 = vmatprep.subr.mxu0 0.0
        %422 = vmatpush1.xpose.msra.mxu0 %v391
        %423 = vmatprep.subr.mxu0 0.0
        %424 = vmatpush1.xpose.msra.mxu0 %v389
        %425 = vmatprep.subr.mxu0 0.0
        %426 = vmatpush2.xpose.msra.mxu0 0.0
        %427 = vmatprep.subr.mxu0 0.0
        %428 = vmatpush2.xpose.msra.mxu0 0.0
        %429 = vmatprep.subr.mxu0 0.0
        %430 = vmatpush2.xpose.msra.mxu0 0.0
        %431 = vmatprep.subr.mxu0 0.0
        %432 = vmatpush2.xpose.msra.mxu0 0.0
        %433 = vmatprep.subr.mxu0 0.0
        %434 = vmatpush2.xpose.msra.mxu0 0.0
        %435 = vmatprep.subr.mxu0 0.0
        %436 = vmatpush2.xpose.msra.mxu0 0.0
        %437 = vmatprep.subr.mxu0 0.0
        %438 = vmatpush2.xpose.msra.mxu0 0.0
        %439 = vmatprep.subr.mxu0 0.0
        %440 = vmatpush2.xpose.msra.mxu0 0.0
        %441 = vmatprep.subr.mxu0 0.0
        %442 = vmatpush2.xpose.msra.mxu0 0.0
        %443 = vmatprep.subr.mxu0 0.0
        %444 = vmatpush2.xpose.msra.mxu0 0.0
        %445 = vmatprep.subr.mxu0 0.0
        %446 = vmatpush2.xpose.msra.mxu0 0.0
        %447 = vmatprep.subr.mxu0 0.0
        %448 = vmatpush2.xpose.msra.mxu0 0.0
        %449 = vmatprep.subr.mxu0 0.0
        %450 = vmatpush2.xpose.msra.mxu0 0.0
        %451 = vmatprep.subr.mxu0 0.0
        %452 = vmatpush2.xpose.msra.mxu0 0.0
        %453 = vmatprep.subr.mxu0 0.0
        %454 = vmatpush2.xpose.msra.mxu0 0.0
        %455 = vmatprep.subr.mxu0 0.0
        %456 = vmatpush2.xpose.msra.mxu0 0.0
        %457 = vmatprep.mubr.f32.mxu0 0.0
        %458 = vmatmul.mubr.f32.gmra.mxu0 %v385
        %v459 = vpop.f32.mrf.mxu0
        %v460 = vadd.f32 %v290, %v459
        %v461 = vpop.f32.mrf.mxu0
        %462 = vmatprep.mubr.f32.mxu0 0.0
        %463 = vmatmul.mubr.f32.gmra.mxu0 %v387
        %v464 = vpop.f32.mrf.mxu0
        %v465 = vadd.f32 %v291, %v464
        %v466 = vpop.f32.mrf.mxu0
        %467 = vdwg.mxu0
        %v468 = vsel %vm384, %v460, -inf
        %469 = vmax.xlane.f32.xlu0 %v468
        %v470 = vpop.xlane.xlu0 %469
        %v471 = vsel %vm384, %v465, -inf
        %472 = vmax.xlane.f32.xlu0 %v471
        %v473 = vpop.xlane.xlu0 %472
        %v474 = vsub.f32 %v460, %v470
        %v475 = vsub.f32 %v465, %v473
        %v476 = vmul.f32 %v474, 1.442695
        %v477 = vpow.pop %v476
        %v478 = vmul.f32 %v475, 1.442695
        %v479 = vpow.pop %v478
        %v480 = vsel %vm384, %v477, 0.0
        %481 = vadd.xlane.f32.xlu0 %v480
        %v482 = vpop.xlane.xlu0 %481
        %v483 = vsel %vm384, %v479, 0.0
        %484 = vadd.xlane.f32.xlu0 %v483
        %v485 = vpop.xlane.xlu0 %484
        %v486 = vrcp.pop %v482
        %v487 = vmul.f32 %v477, %v486
        %v488 = vrcp.pop %v485
        %v489 = vmul.f32 %v479, %v488
        %490 = vrot.lane.b32.xlu0 %v370, 112
        %v491 = vpop.permute.xlu0 %490
        %492 = vrot.lane.b32.xlu0 %v375, 112
        %v493 = vpop.permute.xlu0 %492
        %494 = vrot.lane.b32.xlu0 %v370, 80
        %v495 = vpop.permute.xlu0 %494
        %496 = vrot.lane.b32.xlu0 %v375, 80
        %v497 = vpop.permute.xlu0 %496
        %v498 = vsel %vm384, %v491, 0
        %v500 = vsel %vm384, %v493, 0
        %v502 = vsel %vm384, %v495, 0
        %v504 = vsel %vm384, %v497, 0
        %506 = vmatprep.subr.mxu0 0.0
        %507 = vmatpush1.xpose.msra.mxu0 0.0
        %508 = vmatprep.subr.mxu0 0.0
        %509 = vmatpush1.xpose.msra.mxu0 0.0
        %510 = vmatprep.subr.mxu0 0.0
        %511 = vmatpush1.xpose.msra.mxu0 0.0
        %512 = vmatprep.subr.mxu0 0.0
        %513 = vmatpush1.xpose.msra.mxu0 0.0
        %514 = vmatprep.subr.mxu0 0.0
        %515 = vmatpush1.xpose.msra.mxu0 0.0
        %516 = vmatprep.subr.mxu0 0.0
        %517 = vmatpush1.xpose.msra.mxu0 0.0
        %518 = vmatprep.subr.mxu0 0.0
        %519 = vmatpush1.xpose.msra.mxu0 0.0
        %520 = vmatprep.subr.mxu0 0.0
        %521 = vmatpush1.xpose.msra.mxu0 0.0
        %522 = vmatprep.subr.mxu0 0.0
        %523 = vmatpush1.xpose.msra.mxu0 0.0
        %524 = vmatprep.subr.mxu0 0.0
        %525 = vmatpush1.xpose.msra.mxu0 0.0
        %526 = vmatprep.subr.mxu0 0.0
        %527 = vmatpush1.xpose.msra.mxu0 0.0
        %528 = vmatprep.subr.mxu0 0.0
        %529 = vmatpush1.xpose.msra.mxu0 0.0
        %530 = vmatprep.subr.mxu0 0.0
        %531 = vmatpush1.xpose.msra.mxu0 0.0
        %532 = vmatprep.subr.mxu0 0.0
        %533 = vmatpush1.xpose.msra.mxu0 0.0
        %534 = vmatprep.subr.mxu0 0.0
        %535 = vmatpush1.xpose.msra.mxu0 %v504
        %536 = vmatprep.subr.mxu0 0.0
        %537 = vmatpush1.xpose.msra.mxu0 %v502
        %538 = vmatprep.subr.mxu0 0.0
        %539 = vmatpush2.xpose.msra.mxu0 0.0
        %540 = vmatprep.subr.mxu0 0.0
        %541 = vmatpush2.xpose.msra.mxu0 0.0
        %542 = vmatprep.subr.mxu0 0.0
        %543 = vmatpush2.xpose.msra.mxu0 0.0
        %544 = vmatprep.subr.mxu0 0.0
        %545 = vmatpush2.xpose.msra.mxu0 0.0
        %546 = vmatprep.subr.mxu0 0.0
        %547 = vmatpush2.xpose.msra.mxu0 0.0
        %548 = vmatprep.subr.mxu0 0.0
        %549 = vmatpush2.xpose.msra.mxu0 0.0
        %550 = vmatprep.subr.mxu0 0.0
        %551 = vmatpush2.xpose.msra.mxu0 0.0
        %552 = vmatprep.subr.mxu0 0.0
        %553 = vmatpush2.xpose.msra.mxu0 0.0
        %554 = vmatprep.subr.mxu0 0.0
        %555 = vmatpush2.xpose.msra.mxu0 0.0
        %556 = vmatprep.subr.mxu0 0.0
        %557 = vmatpush2.xpose.msra.mxu0 0.0
        %558 = vmatprep.subr.mxu0 0.0
        %559 = vmatpush2.xpose.msra.mxu0 0.0
        %560 = vmatprep.subr.mxu0 0.0
        %561 = vmatpush2.xpose.msra.mxu0 0.0
        %562 = vmatprep.subr.mxu0 0.0
        %563 = vmatpush2.xpose.msra.mxu0 0.0
        %564 = vmatprep.subr.mxu0 0.0
        %565 = vmatpush2.xpose.msra.mxu0 0.0
        %566 = vmatprep.subr.mxu0 0.0
        %567 = vmatpush2.xpose.msra.mxu0 0.0
        %568 = vmatprep.subr.mxu0 0.0
        %569 = vmatpush2.xpose.msra.mxu0 0.0
        %570 = vmatprep.mubr.f32.mxu0 0.0
        %571 = vmatmul.mubr.f32.gmra.mxu0 %v498
        %v572 = vpop.f32.mrf.mxu0
        %v573 = vadd.f32 %v290, %v572
        %v574 = vpop.f32.mrf.mxu0
        %575 = vmatprep.mubr.f32.mxu0 0.0
        %576 = vmatmul.mubr.f32.gmra.mxu0 %v500
        %v577 = vpop.f32.mrf.mxu0
        %v578 = vadd.f32 %v291, %v577
        %v579 = vpop.f32.mrf.mxu0
        %580 = vdwg.mxu0
        %v581 = vsel %vm384, %v573, -inf
        %582 = vmax.xlane.f32.xlu0 %v581
        %v583 = vpop.xlane.xlu0 %582
        %v584 = vsel %vm384, %v578, -inf
        %585 = vmax.xlane.f32.xlu0 %v584
        %v586 = vpop.xlane.xlu0 %585
        %v587 = vsub.f32 %v573, %v583
        %v588 = vsub.f32 %v578, %v586
        %v589 = vmul.f32 %v587, 1.442695
        %v590 = vpow.pop %v589
        %v591 = vmul.f32 %v588, 1.442695
        %v592 = vpow.pop %v591
        %v593 = vsel %vm384, %v590, 0.0
        %594 = vadd.xlane.f32.xlu0 %v593
        %v595 = vpop.xlane.xlu0 %594
        %v596 = vsel %vm384, %v592, 0.0
        %597 = vadd.xlane.f32.xlu0 %v596
        %v598 = vpop.xlane.xlu0 %597
        %v599 = vrcp.pop %v595
        %v600 = vmul.f32 %v590, %v599
        %v601 = vrcp.pop %v598
        %v602 = vmul.f32 %v592, %v601
        %603 = vrot.lane.b32.xlu0 %v370, 32
        %v604 = vpop.permute.xlu0 %603
        %605 = vrot.lane.b32.xlu0 %v375, 32
        %v606 = vpop.permute.xlu0 %605
        %v610 = vsel %vm384, %v600, 0
        %v613 = vsel %vm384, %v602, 0
        %615 = vmatprep.subr.mxu0 0.0
        %616 = vmatpush1.msra.mxu0 0.0
        %617 = vmatprep.subr.mxu0 0.0
        %618 = vmatpush1.msra.mxu0 0.0
        %619 = vmatprep.subr.mxu0 0.0
        %620 = vmatpush1.msra.mxu0 0.0
        %621 = vmatprep.subr.mxu0 0.0
        %622 = vmatpush1.msra.mxu0 0.0
        %623 = vmatprep.subr.mxu0 0.0
        %624 = vmatpush1.msra.mxu0 0.0
        %625 = vmatprep.subr.mxu0 0.0
        %626 = vmatpush1.msra.mxu0 0.0
        %627 = vmatprep.subr.mxu0 0.0
        %628 = vmatpush1.msra.mxu0 0.0
        %629 = vmatprep.subr.mxu0 0.0
        %630 = vmatpush1.msra.mxu0 0.0
        %631 = vmatprep.subr.mxu0 0.0
        %632 = vmatpush1.msra.mxu0 0.0
        %633 = vmatprep.subr.mxu0 0.0
        %634 = vmatpush1.msra.mxu0 0.0
        %635 = vmatprep.subr.mxu0 0.0
        %636 = vmatpush1.msra.mxu0 0.0
        %637 = vmatprep.subr.mxu0 0.0
        %638 = vmatpush1.msra.mxu0 0.0
        %639 = vmatprep.subr.mxu0 0.0
        %640 = vmatpush1.msra.mxu0 0.0
        %641 = vmatprep.subr.mxu0 0.0
        %642 = vmatpush1.msra.mxu0 0.0
        %643 = vmatprep.subr.mxu0 0.0
        %644 = vmatpush1.msra.mxu0 %v606
        %645 = vmatprep.subr.mxu0 0.0
        %646 = vmatpush1.msra.mxu0 %v604
        %647 = vmatprep.subr.mxu0 0.0
        %648 = vmatpush2.msra.mxu0 0.0
        %649 = vmatprep.subr.mxu0 0.0
        %650 = vmatpush2.msra.mxu0 0.0
        %651 = vmatprep.subr.mxu0 0.0
        %652 = vmatpush2.msra.mxu0 0.0
        %653 = vmatprep.subr.mxu0 0.0
        %654 = vmatpush2.msra.mxu0 0.0
        %655 = vmatprep.subr.mxu0 0.0
        %656 = vmatpush2.msra.mxu0 0.0
        %657 = vmatprep.subr.mxu0 0.0
        %658 = vmatpush2.msra.mxu0 0.0
        %659 = vmatprep.subr.mxu0 0.0
        %660 = vmatpush2.msra.mxu0 0.0
        %661 = vmatprep.subr.mxu0 0.0
        %662 = vmatpush2.msra.mxu0 0.0
        %663 = vmatprep.subr.mxu0 0.0
        %664 = vmatpush2.msra.mxu0 0.0
        %665 = vmatprep.subr.mxu0 0.0
        %666 = vmatpush2.msra.mxu0 0.0
        %667 = vmatprep.subr.mxu0 0.0
        %668 = vmatpush2.msra.mxu0 0.0
        %669 = vmatprep.subr.mxu0 0.0
        %670 = vmatpush2.msra.mxu0 0.0
        %671 = vmatprep.subr.mxu0 0.0
        %672 = vmatpush2.msra.mxu0 0.0
        %673 = vmatprep.subr.mxu0 0.0
        %674 = vmatpush2.msra.mxu0 0.0
        %675 = vmatprep.subr.mxu0 0.0
        %676 = vmatpush2.msra.mxu0 0.0
        %677 = vmatprep.subr.mxu0 0.0
        %678 = vmatpush2.msra.mxu0 0.0
        %679 = vmatprep.mubr.f32.mxu0 0.0
        %680 = vmatmul.mubr.f32.gmra.mxu0 %v610
        %v681 = vpop.f32.mrf.mxu0
        %v682 = vadd.f32 0.0, %v681
        %v683 = vpop.f32.mrf.mxu0
        %684 = vmatprep.mubr.f32.mxu0 0.0
        %685 = vmatmul.mubr.f32.gmra.mxu0 %v613
        %v686 = vpop.f32.mrf.mxu0
        %v687 = vadd.f32 0.0, %v686
        %v688 = vpop.f32.mrf.mxu0
        %689 = vdwg.mxu0
        %690 = vrot.lane.b32.xlu0 %v370, 64
        %v691 = vpop.permute.xlu0 %690
        %692 = vrot.lane.b32.xlu0 %v375, 64
        %v693 = vpop.permute.xlu0 %692
        %v697 = vsel %vm384, %v487, 0
        %v700 = vsel %vm384, %v489, 0
        %702 = vmatprep.subr.mxu0 0.0
        %703 = vmatpush1.msra.mxu0 0.0
        %704 = vmatprep.subr.mxu0 0.0
        %705 = vmatpush1.msra.mxu0 0.0
        %706 = vmatprep.subr.mxu0 0.0
        %707 = vmatpush1.msra.mxu0 0.0
        %708 = vmatprep.subr.mxu0 0.0
        %709 = vmatpush1.msra.mxu0 0.0
        %710 = vmatprep.subr.mxu0 0.0
        %711 = vmatpush1.msra.mxu0 0.0
        %712 = vmatprep.subr.mxu0 0.0
        %713 = vmatpush1.msra.mxu0 0.0
        %714 = vmatprep.subr.mxu0 0.0
        %715 = vmatpush1.msra.mxu0 0.0
        %716 = vmatprep.subr.mxu0 0.0
        %717 = vmatpush1.msra.mxu0 0.0
        %718 = vmatprep.subr.mxu0 0.0
        %719 = vmatpush1.msra.mxu0 0.0
        %720 = vmatprep.subr.mxu0 0.0
        %721 = vmatpush1.msra.mxu0 0.0
        %722 = vmatprep.subr.mxu0 0.0
        %723 = vmatpush1.msra.mxu0 0.0
        %724 = vmatprep.subr.mxu0 0.0
        %725 = vmatpush1.msra.mxu0 0.0
        %726 = vmatprep.subr.mxu0 0.0
        %727 = vmatpush1.msra.mxu0 0.0
        %728 = vmatprep.subr.mxu0 0.0
        %729 = vmatpush1.msra.mxu0 0.0
        %730 = vmatprep.subr.mxu0 0.0
        %731 = vmatpush1.msra.mxu0 %v693
        %732 = vmatprep.subr.mxu0 0.0
        %733 = vmatpush1.msra.mxu0 %v691
        %734 = vmatprep.subr.mxu0 0.0
        %735 = vmatpush2.msra.mxu0 0.0
        %736 = vmatprep.subr.mxu0 0.0
        %737 = vmatpush2.msra.mxu0 0.0
        %738 = vmatprep.subr.mxu0 0.0
        %739 = vmatpush2.msra.mxu0 0.0
        %740 = vmatprep.subr.mxu0 0.0
        %741 = vmatpush2.msra.mxu0 0.0
        %742 = vmatprep.subr.mxu0 0.0
        %743 = vmatpush2.msra.mxu0 0.0
        %744 = vmatprep.subr.mxu0 0.0
        %745 = vmatpush2.msra.mxu0 0.0
        %746 = vmatprep.subr.mxu0 0.0
        %747 = vmatpush2.msra.mxu0 0.0
        %748 = vmatprep.subr.mxu0 0.0
        %749 = vmatpush2.msra.mxu0 0.0
        %750 = vmatprep.subr.mxu0 0.0
        %751 = vmatpush2.msra.mxu0 0.0
        %752 = vmatprep.subr.mxu0 0.0
        %753 = vmatpush2.msra.mxu0 0.0
        %754 = vmatprep.subr.mxu0 0.0
        %755 = vmatpush2.msra.mxu0 0.0
        %756 = vmatprep.subr.mxu0 0.0
        %757 = vmatpush2.msra.mxu0 0.0
        %758 = vmatprep.subr.mxu0 0.0
        %759 = vmatpush2.msra.mxu0 0.0
        %760 = vmatprep.subr.mxu0 0.0
        %761 = vmatpush2.msra.mxu0 0.0
        %762 = vmatprep.subr.mxu0 0.0
        %763 = vmatpush2.msra.mxu0 0.0
        %764 = vmatprep.subr.mxu0 0.0
        %765 = vmatpush2.msra.mxu0 0.0
        %766 = vmatprep.mubr.f32.mxu0 0.0
        %767 = vmatmul.mubr.f32.gmra.mxu0 %v697
        %v768 = vpop.f32.mrf.mxu0
        %v769 = vadd.f32 %v682, %v768
        %v770 = vpop.f32.mrf.mxu0
        %771 = vmatprep.mubr.f32.mxu0 0.0
        %772 = vmatmul.mubr.f32.gmra.mxu0 %v700
        %v773 = vpop.f32.mrf.mxu0
        %v774 = vadd.f32 %v687, %v773
        %v775 = vpop.f32.mrf.mxu0
        %776 = vdwg.mxu0
        %v777 = vadd.f32 %v218, %v769
        %v778 = vadd.f32 %v219, %v774
        %v779 = vsel %vm296, %v777, 0.0
        %780 = vadd.xlane.f32.xlu0 %v779
        %v781 = vpop.xlane.xlu0 %780
        %v782 = vsel %vm296, %v778, 0.0
        %783 = vadd.xlane.f32.xlu0 %v782
        %v784 = vpop.xlane.xlu0 %783
        %v785 = vrcp.pop 32.0
        %v786 = vmul.f32 %v781, %v785
        %v787 = vmul.f32 %v784, %v785
        %v788 = vsub.f32 %v777, %v786
        %v789 = vsub.f32 %v778, %v787
        %v790 = vmul.f32 %v788, %v788
        %v791 = vmul.f32 %v789, %v789
        %v792 = vsel %vm296, %v790, 0.0
        %793 = vadd.xlane.f32.xlu0 %v792
        %v794 = vpop.xlane.xlu0 %793
        %v795 = vsel %vm296, %v791, 0.0
        %796 = vadd.xlane.f32.xlu0 %v795
        %v797 = vpop.xlane.xlu0 %796
        %v798 = vmul.f32 %v794, %v785
        %v799 = vmul.f32 %v797, %v785
        %v800 = vadd.f32 %v798, 1e-05
        %v801 = vadd.f32 %v799, 1e-05
        %v802 = vrsqrt.pop %v800
        %v803 = vrsqrt.pop %v801
        %v804 = vmul.f32 %v788, %v802
        %v805 = vmul.f32 %v789, %v803
        %v806 = vlaneseq
        %v807 = vshrl.u32 %v806, 7
        %v808 = vsub.s32 0, %v807
        %v809 = vrot.slane %v237, %v808
        %v810 = vmul.f32 %v804, %v809
        %v811 = vmul.f32 %v805, %v809
        %v812 = vlaneseq
        %v813 = vshrl.u32 %v812, 7
        %v814 = vsub.s32 0, %v813
        %v815 = vrot.slane %v238, %v814
        %v816 = vadd.f32 %v810, %v815
        %v817 = vadd.f32 %v811, %v815
        %v818 = vlaneseq
        %v819 = vshrl.u32 %v818, 7
        %v820 = vsub.s32 0, %v819
        %v821 = vrot.slane %v239, %v820
        %v823 = vsel %vm296, %v816, 0
        %v826 = vsel %vm296, %v817, 0
        %828 = vmatprep.subr.mxu0 0.0
        %829 = vmatpush1.msra.mxu0 0.0
        %830 = vmatprep.subr.mxu0 0.0
        %831 = vmatpush1.msra.mxu0 0.0
        %832 = vmatprep.subr.mxu0 0.0
        %833 = vmatpush1.msra.mxu0 0.0
        %834 = vmatprep.subr.mxu0 0.0
        %835 = vmatpush1.msra.mxu0 0.0
        %836 = vmatprep.subr.mxu0 0.0
        %837 = vmatpush1.msra.mxu0 0.0
        %838 = vmatprep.subr.mxu0 0.0
        %839 = vmatpush1.msra.mxu0 0.0
        %840 = vmatprep.subr.mxu0 0.0
        %841 = vmatpush1.msra.mxu0 0.0
        %842 = vmatprep.subr.mxu0 0.0
        %843 = vmatpush1.msra.mxu0 0.0
        %844 = vmatprep.subr.mxu0 0.0
        %845 = vmatpush1.msra.mxu0 0.0
        %846 = vmatprep.subr.mxu0 0.0
        %847 = vmatpush1.msra.mxu0 0.0
        %848 = vmatprep.subr.mxu0 0.0
        %849 = vmatpush1.msra.mxu0 0.0
        %850 = vmatprep.subr.mxu0 0.0
        %851 = vmatpush1.msra.mxu0 0.0
        %852 = vmatprep.subr.mxu0 0.0
        %853 = vmatpush1.msra.mxu0 %v227
        %854 = vmatprep.subr.mxu0 0.0
        %855 = vmatpush1.msra.mxu0 %v226
        %856 = vmatprep.subr.mxu0 0.0
        %857 = vmatpush1.msra.mxu0 %v225
        %858 = vmatprep.subr.mxu0 0.0
        %859 = vmatpush1.msra.mxu0 %v224
        %860 = vmatprep.subr.mxu0 0.0
        %861 = vmatpush2.msra.mxu0 0.0
        %862 = vmatprep.subr.mxu0 0.0
        %863 = vmatpush2.msra.mxu0 0.0
        %864 = vmatprep.subr.mxu0 0.0
        %865 = vmatpush2.msra.mxu0 0.0
        %866 = vmatprep.subr.mxu0 0.0
        %867 = vmatpush2.msra.mxu0 0.0
        %868 = vmatprep.subr.mxu0 0.0
        %869 = vmatpush2.msra.mxu0 0.0
        %870 = vmatprep.subr.mxu0 0.0
        %871 = vmatpush2.msra.mxu0 0.0
        %872 = vmatprep.subr.mxu0 0.0
        %873 = vmatpush2.msra.mxu0 0.0
        %874 = vmatprep.subr.mxu0 0.0
        %875 = vmatpush2.msra.mxu0 0.0
        %876 = vmatprep.subr.mxu0 0.0
        %877 = vmatpush2.msra.mxu0 0.0
        %878 = vmatprep.subr.mxu0 0.0
        %879 = vmatpush2.msra.mxu0 0.0
        %880 = vmatprep.subr.mxu0 0.0
        %881 = vmatpush2.msra.mxu0 0.0
        %882 = vmatprep.subr.mxu0 0.0
        %883 = vmatpush2.msra.mxu0 0.0
        %884 = vmatprep.subr.mxu0 0.0
        %885 = vmatpush2.msra.mxu0 0.0
        %886 = vmatprep.subr.mxu0 0.0
        %887 = vmatpush2.msra.mxu0 0.0
        %888 = vmatprep.subr.mxu0 0.0
        %889 = vmatpush2.msra.mxu0 0.0
        %890 = vmatprep.subr.mxu0 0.0
        %891 = vmatpush2.msra.mxu0 0.0
        %892 = vmatprep.mubr.f32.mxu0 0.0
        %893 = vmatmul.mubr.f32.gmra.mxu0 %v823
        %v894 = vpop.f32.mrf.mxu0
        %v895 = vadd.f32 %v821, %v894
        %v896 = vpop.f32.mrf.mxu0
        %897 = vmatprep.mubr.f32.mxu0 0.0
        %898 = vmatmul.mubr.f32.gmra.mxu0 %v826
        %v899 = vpop.f32.mrf.mxu0
        %v900 = vadd.f32 %v821, %v899
        %v901 = vpop.f32.mrf.mxu0
        %902 = vdwg.mxu0
        %v903 = vmax.f32 %v895, 0.0
        %v904 = vmax.f32 %v900, 0.0
        %v905 = vlaneseq
        %v906 = vshrl.u32 %v905, 7
        %v907 = vsub.s32 0, %v906
        %v908 = vrot.slane %v240, %v907
        %vm909 = vcmask 523264
        %v911 = vsel %vm909, %v903, 0
        %v914 = vsel %vm909, %v904, 0
        %916 = vmatprep.subr.mxu0 0.0
        %917 = vmatpush1.msra.mxu0 0.0
        %918 = vmatprep.subr.mxu0 0.0
        %919 = vmatpush1.msra.mxu0 0.0
        %920 = vmatprep.subr.mxu0 0.0
        %921 = vmatpush1.msra.mxu0 0.0
        %922 = vmatprep.subr.mxu0 0.0
        %923 = vmatpush1.msra.mxu0 0.0
        %924 = vmatprep.subr.mxu0 0.0
        %925 = vmatpush1.msra.mxu0 0.0
        %926 = vmatprep.subr.mxu0 0.0
        %927 = vmatpush1.msra.mxu0 0.0
        %928 = vmatprep.subr.mxu0 0.0
        %929 = vmatpush1.msra.mxu0 0.0
        %930 = vmatprep.subr.mxu0 0.0
        %931 = vmatpush1.msra.mxu0 0.0
        %932 = vmatprep.subr.mxu0 0.0
        %933 = vmatpush1.msra.mxu0 %v235
        %934 = vmatprep.subr.mxu0 0.0
        %935 = vmatpush1.msra.mxu0 %v234
        %936 = vmatprep.subr.mxu0 0.0
        %937 = vmatpush1.msra.mxu0 %v233
        %938 = vmatprep.subr.mxu0 0.0
        %939 = vmatpush1.msra.mxu0 %v232
        %940 = vmatprep.subr.mxu0 0.0
        %941 = vmatpush1.msra.mxu0 %v231
        %942 = vmatprep.subr.mxu0 0.0
        %943 = vmatpush1.msra.mxu0 %v230
        %944 = vmatprep.subr.mxu0 0.0
        %945 = vmatpush1.msra.mxu0 %v229
        %946 = vmatprep.subr.mxu0 0.0
        %947 = vmatpush1.msra.mxu0 %v228
        %948 = vmatprep.subr.mxu0 0.0
        %949 = vmatpush2.msra.mxu0 0.0
        %950 = vmatprep.subr.mxu0 0.0
        %951 = vmatpush2.msra.mxu0 0.0
        %952 = vmatprep.subr.mxu0 0.0
        %953 = vmatpush2.msra.mxu0 0.0
        %954 = vmatprep.subr.mxu0 0.0
        %955 = vmatpush2.msra.mxu0 0.0
        %956 = vmatprep.subr.mxu0 0.0
        %957 = vmatpush2.msra.mxu0 0.0
        %958 = vmatprep.subr.mxu0 0.0
        %959 = vmatpush2.msra.mxu0 0.0
        %960 = vmatprep.subr.mxu0 0.0
        %961 = vmatpush2.msra.mxu0 0.0
        %962 = vmatprep.subr.mxu0 0.0
        %963 = vmatpush2.msra.mxu0 0.0
        %964 = vmatprep.subr.mxu0 0.0
        %965 = vmatpush2.msra.mxu0 0.0
        %966 = vmatprep.subr.mxu0 0.0
        %967 = vmatpush2.msra.mxu0 0.0
        %968 = vmatprep.subr.mxu0 0.0
        %969 = vmatpush2.msra.mxu0 0.0
        %970 = vmatprep.subr.mxu0 0.0
        %971 = vmatpush2.msra.mxu0 0.0
        %972 = vmatprep.subr.mxu0 0.0
        %973 = vmatpush2.msra.mxu0 0.0
        %974 = vmatprep.subr.mxu0 0.0
        %975 = vmatpush2.msra.mxu0 0.0
        %976 = vmatprep.subr.mxu0 0.0
        %977 = vmatpush2.msra.mxu0 0.0
        %978 = vmatprep.subr.mxu0 0.0
        %979 = vmatpush2.msra.mxu0 0.0
        %980 = vmatprep.mubr.f32.mxu0 0.0
        %981 = vmatmul.mubr.f32.gmra.mxu0 %v911
        %v982 = vpop.f32.mrf.mxu0
        %v983 = vadd.f32 %v908, %v982
        %v984 = vpop.f32.mrf.mxu0
        %985 = vmatprep.mubr.f32.mxu0 0.0
        %986 = vmatmul.mubr.f32.gmra.mxu0 %v914
        %v987 = vpop.f32.mrf.mxu0
        %v988 = vadd.f32 %v908, %v987
        %v989 = vpop.f32.mrf.mxu0
        %990 = vdwg.mxu0
        %v991 = vadd.f32 %v816, %v983
        %v992 = vadd.f32 %v817, %v988
        %v993 = vsel %vm296, %v991, 0.0
        %994 = vadd.xlane.f32.xlu0 %v993
        %v995 = vpop.xlane.xlu0 %994
        %v996 = vsel %vm296, %v992, 0.0
        %997 = vadd.xlane.f32.xlu0 %v996
        %v998 = vpop.xlane.xlu0 %997
        %v999 = vmul.f32 %v995, %v785
        %v1000 = vmul.f32 %v998, %v785
        %v1001 = vsub.f32 %v991, %v999
        %v1002 = vsub.f32 %v992, %v1000
        %v1003 = vmul.f32 %v1001, %v1001
        %v1004 = vmul.f32 %v1002, %v1002
        %v1005 = vsel %vm296, %v1003, 0.0
        %1006 = vadd.xlane.f32.xlu0 %v1005
        %v1007 = vpop.xlane.xlu0 %1006
        %v1008 = vsel %vm296, %v1004, 0.0
        %1009 = vadd.xlane.f32.xlu0 %v1008
        %v1010 = vpop.xlane.xlu0 %1009
        %v1011 = vmul.f32 %v1007, %v785
        %v1012 = vmul.f32 %v1010, %v785
        %v1013 = vadd.f32 %v1011, 1e-05
        %v1014 = vadd.f32 %v1012, 1e-05
        %v1015 = vrsqrt.pop %v1013
        %v1016 = vrsqrt.pop %v1014
        %v1017 = vmul.f32 %v1001, %v1015
        %v1018 = vmul.f32 %v1002, %v1016
        %v1019 = vlaneseq
        %v1020 = vshrl.u32 %v1019, 7
        %v1021 = vsub.s32 0, %v1020
        %v1022 = vrot.slane %v241, %v1021
        %v1023 = vmul.f32 %v1017, %v1022
        %v1024 = vmul.f32 %v1018, %v1022
        %v1025 = vlaneseq
        %v1026 = vshrl.u32 %v1025, 7
        %v1027 = vsub.s32 0, %v1026
        %v1028 = vrot.slane %v242, %v1027
        %v1029 = vadd.f32 %v1023, %v1028
        %v1030 = vadd.f32 %v1024, %v1028
        %v1031 = vmax.f32 %v1029, 0.0
        %v1032 = vmax.f32 %v1030, 0.0
        %v1034 = vsel %vm296, %v1031, 0
        %v1037 = vsel %vm296, %v1032, 0
        %1039 = vmatprep.subr.mxu0 0.0
        %1040 = vmatpush1.msra.mxu0 0.0
        %1041 = vmatprep.subr.mxu0 0.0
        %1042 = vmatpush1.msra.mxu0 0.0
        %1043 = vmatprep.subr.mxu0 0.0
        %1044 = vmatpush1.msra.mxu0 0.0
        %1045 = vmatprep.subr.mxu0 0.0
        %1046 = vmatpush1.msra.mxu0 0.0
        %1047 = vmatprep.subr.mxu0 0.0
        %1048 = vmatpush1.msra.mxu0 0.0
        %1049 = vmatprep.subr.mxu0 0.0
        %1050 = vmatpush1.msra.mxu0 0.0
        %1051 = vmatprep.subr.mxu0 0.0
        %1052 = vmatpush1.msra.mxu0 0.0
        %1053 = vmatprep.subr.mxu0 0.0
        %1054 = vmatpush1.msra.mxu0 0.0
        %1055 = vmatprep.subr.mxu0 0.0
        %1056 = vmatpush1.msra.mxu0 0.0
        %1057 = vmatprep.subr.mxu0 0.0
        %1058 = vmatpush1.msra.mxu0 0.0
        %1059 = vmatprep.subr.mxu0 0.0
        %1060 = vmatpush1.msra.mxu0 0.0
        %1061 = vmatprep.subr.mxu0 0.0
        %1062 = vmatpush1.msra.mxu0 0.0
        %1063 = vmatprep.subr.mxu0 0.0
        %1064 = vmatpush1.msra.mxu0 %v223
        %1065 = vmatprep.subr.mxu0 0.0
        %1066 = vmatpush1.msra.mxu0 %v222
        %1067 = vmatprep.subr.mxu0 0.0
        %1068 = vmatpush1.msra.mxu0 %v221
        %1069 = vmatprep.subr.mxu0 0.0
        %1070 = vmatpush1.msra.mxu0 %v220
        %1071 = vmatprep.subr.mxu0 0.0
        %1072 = vmatpush2.msra.mxu0 0.0
        %1073 = vmatprep.subr.mxu0 0.0
        %1074 = vmatpush2.msra.mxu0 0.0
        %1075 = vmatprep.subr.mxu0 0.0
        %1076 = vmatpush2.msra.mxu0 0.0
        %1077 = vmatprep.subr.mxu0 0.0
        %1078 = vmatpush2.msra.mxu0 0.0
        %1079 = vmatprep.subr.mxu0 0.0
        %1080 = vmatpush2.msra.mxu0 0.0
        %1081 = vmatprep.subr.mxu0 0.0
        %1082 = vmatpush2.msra.mxu0 0.0
        %1083 = vmatprep.subr.mxu0 0.0
        %1084 = vmatpush2.msra.mxu0 0.0
        %1085 = vmatprep.subr.mxu0 0.0
        %1086 = vmatpush2.msra.mxu0 0.0
        %1087 = vmatprep.subr.mxu0 0.0
        %1088 = vmatpush2.msra.mxu0 0.0
        %1089 = vmatprep.subr.mxu0 0.0
        %1090 = vmatpush2.msra.mxu0 0.0
        %1091 = vmatprep.subr.mxu0 0.0
        %1092 = vmatpush2.msra.mxu0 0.0
        %1093 = vmatprep.subr.mxu0 0.0
        %1094 = vmatpush2.msra.mxu0 0.0
        %1095 = vmatprep.subr.mxu0 0.0
        %1096 = vmatpush2.msra.mxu0 0.0
        %1097 = vmatprep.subr.mxu0 0.0
        %1098 = vmatpush2.msra.mxu0 0.0
        %1099 = vmatprep.subr.mxu0 0.0
        %1100 = vmatpush2.msra.mxu0 0.0
        %1101 = vmatprep.subr.mxu0 0.0
        %1102 = vmatpush2.msra.mxu0 0.0
        %1103 = vmatprep.mubr.f32.mxu0 0.0
        %1104 = vmatmul.mubr.f32.gmra.mxu0 %v1034
        %v1105 = vpop.f32.mrf.mxu0
        %v1106 = vadd.f32 %v295, %v1105
        %v1107 = vpop.f32.mrf.mxu0
        %1108 = vmatprep.mubr.f32.mxu0 0.0
        %1109 = vmatmul.mubr.f32.gmra.mxu0 %v1037
        %v1110 = vpop.f32.mrf.mxu0
        %v1111 = vadd.f32 %v295, %v1110
        %v1112 = vpop.f32.mrf.mxu0
        %1113 = vdwg.mxu0
        %1116 = vrot.lane.b32.xlu0 %v1106, 96
        %v1117 = vpop.permute.xlu0 %1116
        %1118 = vrot.lane.b32.xlu0 %v1111, 96
        %v1119 = vpop.permute.xlu0 %1118
        %v1120 = vsel %vm384, %v1106, 0
        %v1122 = vsel %vm384, %v1111, 0
        %v1124 = vsel %vm384, %v1117, 0
        %v1126 = vsel %vm384, %v1119, 0
        %1128 = vmatprep.subr.mxu0 0.0
        %1129 = vmatpush1.xpose.msra.mxu0 0.0
        %1130 = vmatprep.subr.mxu0 0.0
        %1131 = vmatpush1.xpose.msra.mxu0 0.0
        %1132 = vmatprep.subr.mxu0 0.0
        %1133 = vmatpush1.xpose.msra.mxu0 0.0
        %1134 = vmatprep.subr.mxu0 0.0
        %1135 = vmatpush1.xpose.msra.mxu0 0.0
        %1136 = vmatprep.subr.mxu0 0.0
        %1137 = vmatpush1.xpose.msra.mxu0 0.0
        %1138 = vmatprep.subr.mxu0 0.0
        %1139 = vmatpush1.xpose.msra.mxu0 0.0
        %1140 = vmatprep.subr.mxu0 0.0
        %1141 = vmatpush1.xpose.msra.mxu0 0.0
        %1142 = vmatprep.subr.mxu0 0.0
        %1143 = vmatpush1.xpose.msra.mxu0 0.0
        %1144 = vmatprep.subr.mxu0 0.0
        %1145 = vmatpush1.xpose.msra.mxu0 0.0
        %1146 = vmatprep.subr.mxu0 0.0
        %1147 = vmatpush1.xpose.msra.mxu0 0.0
        %1148 = vmatprep.subr.mxu0 0.0
        %1149 = vmatpush1.xpose.msra.mxu0 0.0
        %1150 = vmatprep.subr.mxu0 0.0
        %1151 = vmatpush1.xpose.msra.mxu0 0.0
        %1152 = vmatprep.subr.mxu0 0.0
        %1153 = vmatpush1.xpose.msra.mxu0 0.0
        %1154 = vmatprep.subr.mxu0 0.0
        %1155 = vmatpush1.xpose.msra.mxu0 0.0
        %1156 = vmatprep.subr.mxu0 0.0
        %1157 = vmatpush1.xpose.msra.mxu0 %v1126
        %1158 = vmatprep.subr.mxu0 0.0
        %1159 = vmatpush1.xpose.msra.mxu0 %v1124
        %1160 = vmatprep.subr.mxu0 0.0
        %1161 = vmatpush2.xpose.msra.mxu0 0.0
        %1162 = vmatprep.subr.mxu0 0.0
        %1163 = vmatpush2.xpose.msra.mxu0 0.0
        %1164 = vmatprep.subr.mxu0 0.0
        %1165 = vmatpush2.xpose.msra.mxu0 0.0
        %1166 = vmatprep.subr.mxu0 0.0
        %1167 = vmatpush2.xpose.msra.mxu0 0.0
        %1168 = vmatprep.subr.mxu0 0.0
        %1169 = vmatpush2.xpose.msra.mxu0 0.0
        %1170 = vmatprep.subr.mxu0 0.0
        %1171 = vmatpush2.xpose.msra.mxu0 0.0
        %1172 = vmatprep.subr.mxu0 0.0
        %1173 = vmatpush2.xpose.msra.mxu0 0.0
        %1174 = vmatprep.subr.mxu0 0.0
        %1175 = vmatpush2.xpose.msra.mxu0 0.0
        %1176 = vmatprep.subr.mxu0 0.0
        %1177 = vmatpush2.xpose.msra.mxu0 0.0
        %1178 = vmatprep.subr.mxu0 0.0
        %1179 = vmatpush2.xpose.msra.mxu0 0.0
        %1180 = vmatprep.subr.mxu0 0.0
        %1181 = vmatpush2.xpose.msra.mxu0 0.0
        %1182 = vmatprep.subr.mxu0 0.0
        %1183 = vmatpush2.xpose.msra.mxu0 0.0
        %1184 = vmatprep.subr.mxu0 0.0
        %1185 = vmatpush2.xpose.msra.mxu0 0.0
        %1186 = vmatprep.subr.mxu0 0.0
        %1187 = vmatpush2.xpose.msra.mxu0 0.0
        %1188 = vmatprep.subr.mxu0 0.0
        %1189 = vmatpush2.xpose.msra.mxu0 0.0
        %1190 = vmatprep.subr.mxu0 0.0
        %1191 = vmatpush2.xpose.msra.mxu0 0.0
        %1192 = vmatprep.mubr.f32.mxu0 0.0
        %1193 = vmatmul.mubr.f32.gmra.mxu0 %v1120
        %v1194 = vpop.f32.mrf.mxu0
        %v1195 = vadd.f32 %v290, %v1194
        %v1196 = vpop.f32.mrf.mxu0
        %1197 = vmatprep.mubr.f32.mxu0 0.0
        %1198 = vmatmul.mubr.f32.gmra.mxu0 %v1122
        %v1199 = vpop.f32.mrf.mxu0
        %v1200 = vadd.f32 %v291, %v1199
        %v1201 = vpop.f32.mrf.mxu0
        %1202 = vdwg.mxu0
        %v1203 = vsel %vm384, %v1195, -inf
        %1204 = vmax.xlane.f32.xlu0 %v1203
        %v1205 = vpop.xlane.xlu0 %1204
        %v1206 = vsel %vm384, %v1200, -inf
        %1207 = vmax.xlane.f32.xlu0 %v1206
        %v1208 = vpop.xlane.xlu0 %1207
        %v1209 = vsub.f32 %v1195, %v1205
        %v1210 = vsub.f32 %v1200, %v1208
        %v1211 = vmul.f32 %v1209, 1.442695
        %v1212 = vpow.pop %v1211
        %v1213 = vmul.f32 %v1210, 1.442695
        %v1214 = vpow.pop %v1213
        %v1215 = vsel %vm384, %v1212, 0.0
        %1216 = vadd.xlane.f32.xlu0 %v1215
        %v1217 = vpop.xlane.xlu0 %1216
        %v1218 = vsel %vm384, %v1214, 0.0
        %1219 = vadd.xlane.f32.xlu0 %v1218
        %v1220 = vpop.xlane.xlu0 %1219
        %v1221 = vrcp.pop %v1217
        %v1222 = vmul.f32 %v1212, %v1221
        %v1223 = vrcp.pop %v1220
        %v1224 = vmul.f32 %v1214, %v1223
        %1225 = vrot.lane.b32.xlu0 %v1106, 112
        %v1226 = vpop.permute.xlu0 %1225
        %1227 = vrot.lane.b32.xlu0 %v1111, 112
        %v1228 = vpop.permute.xlu0 %1227
        %1229 = vrot.lane.b32.xlu0 %v1106, 80
        %v1230 = vpop.permute.xlu0 %1229
        %1231 = vrot.lane.b32.xlu0 %v1111, 80
        %v1232 = vpop.permute.xlu0 %1231
        %v1233 = vsel %vm384, %v1226, 0
        %v1235 = vsel %vm384, %v1228, 0
        %v1237 = vsel %vm384, %v1230, 0
        %v1239 = vsel %vm384, %v1232, 0
        %1241 = vmatprep.subr.mxu0 0.0
        %1242 = vmatpush1.xpose.msra.mxu0 0.0
        %1243 = vmatprep.subr.mxu0 0.0
        %1244 = vmatpush1.xpose.msra.mxu0 0.0
        %1245 = vmatprep.subr.mxu0 0.0
        %1246 = vmatpush1.xpose.msra.mxu0 0.0
        %1247 = vmatprep.subr.mxu0 0.0
        %1248 = vmatpush1.xpose.msra.mxu0 0.0
        %1249 = vmatprep.subr.mxu0 0.0
        %1250 = vmatpush1.xpose.msra.mxu0 0.0
        %1251 = vmatprep.subr.mxu0 0.0
        %1252 = vmatpush1.xpose.msra.mxu0 0.0
        %1253 = vmatprep.subr.mxu0 0.0
        %1254 = vmatpush1.xpose.msra.mxu0 0.0
        %1255 = vmatprep.subr.mxu0 0.0
        %1256 = vmatpush1.xpose.msra.mxu0 0.0
        %1257 = vmatprep.subr.mxu0 0.0
        %1258 = vmatpush1.xpose.msra.mxu0 0.0
        %1259 = vmatprep.subr.mxu0 0.0
        %1260 = vmatpush1.xpose.msra.mxu0 0.0
        %1261 = vmatprep.subr.mxu0 0.0
        %1262 = vmatpush1.xpose.msra.mxu0 0.0
        %1263 = vmatprep.subr.mxu0 0.0
        %1264 = vmatpush1.xpose.msra.mxu0 0.0
        %1265 = vmatprep.subr.mxu0 0.0
        %1266 = vmatpush1.xpose.msra.mxu0 0.0
        %1267 = vmatprep.subr.mxu0 0.0
        %1268 = vmatpush1.xpose.msra.mxu0 0.0
        %1269 = vmatprep.subr.mxu0 0.0
        %1270 = vmatpush1.xpose.msra.mxu0 %v1239
        %1271 = vmatprep.subr.mxu0 0.0
        %1272 = vmatpush1.xpose.msra.mxu0 %v1237
        %1273 = vmatprep.subr.mxu0 0.0
        %1274 = vmatpush2.xpose.msra.mxu0 0.0
        %1275 = vmatprep.subr.mxu0 0.0
        %1276 = vmatpush2.xpose.msra.mxu0 0.0
        %1277 = vmatprep.subr.mxu0 0.0
        %1278 = vmatpush2.xpose.msra.mxu0 0.0
        %1279 = vmatprep.subr.mxu0 0.0
        %1280 = vmatpush2.xpose.msra.mxu0 0.0
        %1281 = vmatprep.subr.mxu0 0.0
        %1282 = vmatpush2.xpose.msra.mxu0 0.0
        %1283 = vmatprep.subr.mxu0 0.0
        %1284 = vmatpush2.xpose.msra.mxu0 0.0
        %1285 = vmatprep.subr.mxu0 0.0
        %1286 = vmatpush2.xpose.msra.mxu0 0.0
        %1287 = vmatprep.subr.mxu0 0.0
        %1288 = vmatpush2.xpose.msra.mxu0 0.0
        %1289 = vmatprep.subr.mxu0 0.0
        %1290 = vmatpush2.xpose.msra.mxu0 0.0
        %1291 = vmatprep.subr.mxu0 0.0
        %1292 = vmatpush2.xpose.msra.mxu0 0.0
        %1293 = vmatprep.subr.mxu0 0.0
        %1294 = vmatpush2.xpose.msra.mxu0 0.0
        %1295 = vmatprep.subr.mxu0 0.0
        %1296 = vmatpush2.xpose.msra.mxu0 0.0
        %1297 = vmatprep.subr.mxu0 0.0
        %1298 = vmatpush2.xpose.msra.mxu0 0.0
        %1299 = vmatprep.subr.mxu0 0.0
        %1300 = vmatpush2.xpose.msra.mxu0 0.0
        %1301 = vmatprep.subr.mxu0 0.0
        %1302 = vmatpush2.xpose.msra.mxu0 0.0
        %1303 = vmatprep.subr.mxu0 0.0
        %1304 = vmatpush2.xpose.msra.mxu0 0.0
        %1305 = vmatprep.mubr.f32.mxu0 0.0
        %1306 = vmatmul.mubr.f32.gmra.mxu0 %v1233
        %v1307 = vpop.f32.mrf.mxu0
        %v1308 = vadd.f32 %v290, %v1307
        %v1309 = vpop.f32.mrf.mxu0
        %1310 = vmatprep.mubr.f32.mxu0 0.0
        %1311 = vmatmul.mubr.f32.gmra.mxu0 %v1235
        %v1312 = vpop.f32.mrf.mxu0
        %v1313 = vadd.f32 %v291, %v1312
        %v1314 = vpop.f32.mrf.mxu0
        %1315 = vdwg.mxu0
        %v1316 = vsel %vm384, %v1308, -inf
        %1317 = vmax.xlane.f32.xlu0 %v1316
        %v1318 = vpop.xlane.xlu0 %1317
        %v1319 = vsel %vm384, %v1313, -inf
        %1320 = vmax.xlane.f32.xlu0 %v1319
        %v1321 = vpop.xlane.xlu0 %1320
        %v1322 = vsub.f32 %v1308, %v1318
        %v1323 = vsub.f32 %v1313, %v1321
        %v1324 = vmul.f32 %v1322, 1.442695
        %v1325 = vpow.pop %v1324
        %v1326 = vmul.f32 %v1323, 1.442695
        %v1327 = vpow.pop %v1326
        %v1328 = vsel %vm384, %v1325, 0.0
        %1329 = vadd.xlane.f32.xlu0 %v1328
        %v1330 = vpop.xlane.xlu0 %1329
        %v1331 = vsel %vm384, %v1327, 0.0
        %1332 = vadd.xlane.f32.xlu0 %v1331
        %v1333 = vpop.xlane.xlu0 %1332
        %v1334 = vrcp.pop %v1330
        %v1335 = vmul.f32 %v1325, %v1334
        %v1336 = vrcp.pop %v1333
        %v1337 = vmul.f32 %v1327, %v1336
        %1338 = vrot.lane.b32.xlu0 %v1106, 32
        %v1339 = vpop.permute.xlu0 %1338
        %1340 = vrot.lane.b32.xlu0 %v1111, 32
        %v1341 = vpop.permute.xlu0 %1340
        %v1345 = vsel %vm384, %v1335, 0
        %v1348 = vsel %vm384, %v1337, 0
        %1350 = vmatprep.subr.mxu0 0.0
        %1351 = vmatpush1.msra.mxu0 0.0
        %1352 = vmatprep.subr.mxu0 0.0
        %1353 = vmatpush1.msra.mxu0 0.0
        %1354 = vmatprep.subr.mxu0 0.0
        %1355 = vmatpush1.msra.mxu0 0.0
        %1356 = vmatprep.subr.mxu0 0.0
        %1357 = vmatpush1.msra.mxu0 0.0
        %1358 = vmatprep.subr.mxu0 0.0
        %1359 = vmatpush1.msra.mxu0 0.0
        %1360 = vmatprep.subr.mxu0 0.0
        %1361 = vmatpush1.msra.mxu0 0.0
        %1362 = vmatprep.subr.mxu0 0.0
        %1363 = vmatpush1.msra.mxu0 0.0
        %1364 = vmatprep.subr.mxu0 0.0
        %1365 = vmatpush1.msra.mxu0 0.0
        %1366 = vmatprep.subr.mxu0 0.0
        %1367 = vmatpush1.msra.mxu0 0.0
        %1368 = vmatprep.subr.mxu0 0.0
        %1369 = vmatpush1.msra.mxu0 0.0
        %1370 = vmatprep.subr.mxu0 0.0
        %1371 = vmatpush1.msra.mxu0 0.0
        %1372 = vmatprep.subr.mxu0 0.0
        %1373 = vmatpush1.msra.mxu0 0.0
        %1374 = vmatprep.subr.mxu0 0.0
        %1375 = vmatpush1.msra.mxu0 0.0
        %1376 = vmatprep.subr.mxu0 0.0
        %1377 = vmatpush1.msra.mxu0 0.0
        %1378 = vmatprep.subr.mxu0 0.0
        %1379 = vmatpush1.msra.mxu0 %v1341
        %1380 = vmatprep.subr.mxu0 0.0
        %1381 = vmatpush1.msra.mxu0 %v1339
        %1382 = vmatprep.subr.mxu0 0.0
        %1383 = vmatpush2.msra.mxu0 0.0
        %1384 = vmatprep.subr.mxu0 0.0
        %1385 = vmatpush2.msra.mxu0 0.0
        %1386 = vmatprep.subr.mxu0 0.0
        %1387 = vmatpush2.msra.mxu0 0.0
        %1388 = vmatprep.subr.mxu0 0.0
        %1389 = vmatpush2.msra.mxu0 0.0
        %1390 = vmatprep.subr.mxu0 0.0
        %1391 = vmatpush2.msra.mxu0 0.0
        %1392 = vmatprep.subr.mxu0 0.0
        %1393 = vmatpush2.msra.mxu0 0.0
        %1394 = vmatprep.subr.mxu0 0.0
        %1395 = vmatpush2.msra.mxu0 0.0
        %1396 = vmatprep.subr.mxu0 0.0
        %1397 = vmatpush2.msra.mxu0 0.0
        %1398 = vmatprep.subr.mxu0 0.0
        %1399 = vmatpush2.msra.mxu0 0.0
        %1400 = vmatprep.subr.mxu0 0.0
        %1401 = vmatpush2.msra.mxu0 0.0
        %1402 = vmatprep.subr.mxu0 0.0
        %1403 = vmatpush2.msra.mxu0 0.0
        %1404 = vmatprep.subr.mxu0 0.0
        %1405 = vmatpush2.msra.mxu0 0.0
        %1406 = vmatprep.subr.mxu0 0.0
        %1407 = vmatpush2.msra.mxu0 0.0
        %1408 = vmatprep.subr.mxu0 0.0
        %1409 = vmatpush2.msra.mxu0 0.0
        %1410 = vmatprep.subr.mxu0 0.0
        %1411 = vmatpush2.msra.mxu0 0.0
        %1412 = vmatprep.subr.mxu0 0.0
        %1413 = vmatpush2.msra.mxu0 0.0
        %1414 = vmatprep.mubr.f32.mxu0 0.0
        %1415 = vmatmul.mubr.f32.gmra.mxu0 %v1345
        %v1416 = vpop.f32.mrf.mxu0
        %v1417 = vadd.f32 0.0, %v1416
        %v1418 = vpop.f32.mrf.mxu0
        %1419 = vmatprep.mubr.f32.mxu0 0.0
        %1420 = vmatmul.mubr.f32.gmra.mxu0 %v1348
        %v1421 = vpop.f32.mrf.mxu0
        %v1422 = vadd.f32 0.0, %v1421
        %v1423 = vpop.f32.mrf.mxu0
        %1424 = vdwg.mxu0
        %1425 = vrot.lane.b32.xlu0 %v1106, 64
        %v1426 = vpop.permute.xlu0 %1425
        %1427 = vrot.lane.b32.xlu0 %v1111, 64
        %v1428 = vpop.permute.xlu0 %1427
        %v1432 = vsel %vm384, %v1222, 0
        %v1435 = vsel %vm384, %v1224, 0
        %1437 = vmatprep.subr.mxu0 0.0
        %1438 = vmatpush1.msra.mxu0 0.0
        %1439 = vmatprep.subr.mxu0 0.0
        %1440 = vmatpush1.msra.mxu0 0.0
        %1441 = vmatprep.subr.mxu0 0.0
        %1442 = vmatpush1.msra.mxu0 0.0
        %1443 = vmatprep.subr.mxu0 0.0
        %1444 = vmatpush1.msra.mxu0 0.0
        %1445 = vmatprep.subr.mxu0 0.0
        %1446 = vmatpush1.msra.mxu0 0.0
        %1447 = vmatprep.subr.mxu0 0.0
        %1448 = vmatpush1.msra.mxu0 0.0
        %1449 = vmatprep.subr.mxu0 0.0
        %1450 = vmatpush1.msra.mxu0 0.0
        %1451 = vmatprep.subr.mxu0 0.0
        %1452 = vmatpush1.msra.mxu0 0.0
        %1453 = vmatprep.subr.mxu0 0.0
        %1454 = vmatpush1.msra.mxu0 0.0
        %1455 = vmatprep.subr.mxu0 0.0
        %1456 = vmatpush1.msra.mxu0 0.0
        %1457 = vmatprep.subr.mxu0 0.0
        %1458 = vmatpush1.msra.mxu0 0.0
        %1459 = vmatprep.subr.mxu0 0.0
        %1460 = vmatpush1.msra.mxu0 0.0
        %1461 = vmatprep.subr.mxu0 0.0
        %1462 = vmatpush1.msra.mxu0 0.0
        %1463 = vmatprep.subr.mxu0 0.0
        %1464 = vmatpush1.msra.mxu0 0.0
        %1465 = vmatprep.subr.mxu0 0.0
        %1466 = vmatpush1.msra.mxu0 %v1428
        %1467 = vmatprep.subr.mxu0 0.0
        %1468 = vmatpush1.msra.mxu0 %v1426
        %1469 = vmatprep.subr.mxu0 0.0
        %1470 = vmatpush2.msra.mxu0 0.0
        %1471 = vmatprep.subr.mxu0 0.0
        %1472 = vmatpush2.msra.mxu0 0.0
        %1473 = vmatprep.subr.mxu0 0.0
        %1474 = vmatpush2.msra.mxu0 0.0
        %1475 = vmatprep.subr.mxu0 0.0
        %1476 = vmatpush2.msra.mxu0 0.0
        %1477 = vmatprep.subr.mxu0 0.0
        %1478 = vmatpush2.msra.mxu0 0.0
        %1479 = vmatprep.subr.mxu0 0.0
        %1480 = vmatpush2.msra.mxu0 0.0
        %1481 = vmatprep.subr.mxu0 0.0
        %1482 = vmatpush2.msra.mxu0 0.0
        %1483 = vmatprep.subr.mxu0 0.0
        %1484 = vmatpush2.msra.mxu0 0.0
        %1485 = vmatprep.subr.mxu0 0.0
        %1486 = vmatpush2.msra.mxu0 0.0
        %1487 = vmatprep.subr.mxu0 0.0
        %1488 = vmatpush2.msra.mxu0 0.0
        %1489 = vmatprep.subr.mxu0 0.0
        %1490 = vmatpush2.msra.mxu0 0.0
        %1491 = vmatprep.subr.mxu0 0.0
        %1492 = vmatpush2.msra.mxu0 0.0
        %1493 = vmatprep.subr.mxu0 0.0
        %1494 = vmatpush2.msra.mxu0 0.0
        %1495 = vmatprep.subr.mxu0 0.0
        %1496 = vmatpush2.msra.mxu0 0.0
        %1497 = vmatprep.subr.mxu0 0.0
        %1498 = vmatpush2.msra.mxu0 0.0
        %1499 = vmatprep.subr.mxu0 0.0
        %1500 = vmatpush2.msra.mxu0 0.0
        %1501 = vmatprep.mubr.f32.mxu0 0.0
        %1502 = vmatmul.mubr.f32.gmra.mxu0 %v1432
        %v1503 = vpop.f32.mrf.mxu0
        %v1504 = vadd.f32 %v1417, %v1503
        %v1505 = vpop.f32.mrf.mxu0
        %1506 = vmatprep.mubr.f32.mxu0 0.0
        %1507 = vmatmul.mubr.f32.gmra.mxu0 %v1435
        %v1508 = vpop.f32.mrf.mxu0
        %v1509 = vadd.f32 %v1422, %v1508
        %v1510 = vpop.f32.mrf.mxu0
        %1511 = vdwg.mxu0
        %v1512 = vadd.f32 %v1031, %v1504
        %v1513 = vadd.f32 %v1032, %v1509
        %v1514 = vsel %vm296, %v1512, 0.0
        %1515 = vadd.xlane.f32.xlu0 %v1514
        %v1516 = vpop.xlane.xlu0 %1515
        %v1517 = vsel %vm296, %v1513, 0.0
        %1518 = vadd.xlane.f32.xlu0 %v1517
        %v1519 = vpop.xlane.xlu0 %1518
        %v1520 = vmul.f32 %v1516, %v785
        %v1521 = vmul.f32 %v1519, %v785
        %v1522 = vsub.f32 %v1512, %v1520
        %v1523 = vsub.f32 %v1513, %v1521
        %v1524 = vmul.f32 %v1522, %v1522
        %v1525 = vmul.f32 %v1523, %v1523
        %v1526 = vsel %vm296, %v1524, 0.0
        %1527 = vadd.xlane.f32.xlu0 %v1526
        %v1528 = vpop.xlane.xlu0 %1527
        %v1529 = vsel %vm296, %v1525, 0.0
        %1530 = vadd.xlane.f32.xlu0 %v1529
        %v1531 = vpop.xlane.xlu0 %1530
        %v1532 = vmul.f32 %v1528, %v785
        %v1533 = vmul.f32 %v1531, %v785
        %v1534 = vadd.f32 %v1532, 1e-05
        %v1535 = vadd.f32 %v1533, 1e-05
        %v1536 = vrsqrt.pop %v1534
        %v1537 = vrsqrt.pop %v1535
        %v1538 = vmul.f32 %v1522, %v1536
        %v1539 = vmul.f32 %v1523, %v1537
        %v1540 = vmul.f32 %v1538, %v809
        %v1541 = vmul.f32 %v1539, %v809
        %v1542 = vadd.f32 %v1540, %v815
        %v1543 = vadd.f32 %v1541, %v815
        %v1545 = vsel %vm296, %v1542, 0
        %v1548 = vsel %vm296, %v1543, 0
        %1550 = vmatprep.subr.mxu0 0.0
        %1551 = vmatpush1.msra.mxu0 0.0
        %1552 = vmatprep.subr.mxu0 0.0
        %1553 = vmatpush1.msra.mxu0 0.0
        %1554 = vmatprep.subr.mxu0 0.0
        %1555 = vmatpush1.msra.mxu0 0.0
        %1556 = vmatprep.subr.mxu0 0.0
        %1557 = vmatpush1.msra.mxu0 0.0
        %1558 = vmatprep.subr.mxu0 0.0
        %1559 = vmatpush1.msra.mxu0 0.0
        %1560 = vmatprep.subr.mxu0 0.0
        %1561 = vmatpush1.msra.mxu0 0.0
        %1562 = vmatprep.subr.mxu0 0.0
        %1563 = vmatpush1.msra.mxu0 0.0
        %1564 = vmatprep.subr.mxu0 0.0
        %1565 = vmatpush1.msra.mxu0 0.0
        %1566 = vmatprep.subr.mxu0 0.0
        %1567 = vmatpush1.msra.mxu0 0.0
        %1568 = vmatprep.subr.mxu0 0.0
        %1569 = vmatpush1.msra.mxu0 0.0
        %1570 = vmatprep.subr.mxu0 0.0
        %1571 = vmatpush1.msra.mxu0 0.0
        %1572 = vmatprep.subr.mxu0 0.0
        %1573 = vmatpush1.msra.mxu0 0.0
        %1574 = vmatprep.subr.mxu0 0.0
        %1575 = vmatpush1.msra.mxu0 %v227
        %1576 = vmatprep.subr.mxu0 0.0
        %1577 = vmatpush1.msra.mxu0 %v226
        %1578 = vmatprep.subr.mxu0 0.0
        %1579 = vmatpush1.msra.mxu0 %v225
        %1580 = vmatprep.subr.mxu0 0.0
        %1581 = vmatpush1.msra.mxu0 %v224
        %1582 = vmatprep.subr.mxu0 0.0
        %1583 = vmatpush2.msra.mxu0 0.0
        %1584 = vmatprep.subr.mxu0 0.0
        %1585 = vmatpush2.msra.mxu0 0.0
        %1586 = vmatprep.subr.mxu0 0.0
        %1587 = vmatpush2.msra.mxu0 0.0
        %1588 = vmatprep.subr.mxu0 0.0
        %1589 = vmatpush2.msra.mxu0 0.0
        %1590 = vmatprep.subr.mxu0 0.0
        %1591 = vmatpush2.msra.mxu0 0.0
        %1592 = vmatprep.subr.mxu0 0.0
        %1593 = vmatpush2.msra.mxu0 0.0
        %1594 = vmatprep.subr.mxu0 0.0
        %1595 = vmatpush2.msra.mxu0 0.0
        %1596 = vmatprep.subr.mxu0 0.0
        %1597 = vmatpush2.msra.mxu0 0.0
        %1598 = vmatprep.subr.mxu0 0.0
        %1599 = vmatpush2.msra.mxu0 0.0
        %1600 = vmatprep.subr.mxu0 0.0
        %1601 = vmatpush2.msra.mxu0 0.0
        %1602 = vmatprep.subr.mxu0 0.0
        %1603 = vmatpush2.msra.mxu0 0.0
        %1604 = vmatprep.subr.mxu0 0.0
        %1605 = vmatpush2.msra.mxu0 0.0
        %1606 = vmatprep.subr.mxu0 0.0
        %1607 = vmatpush2.msra.mxu0 0.0
        %1608 = vmatprep.subr.mxu0 0.0
        %1609 = vmatpush2.msra.mxu0 0.0
        %1610 = vmatprep.subr.mxu0 0.0
        %1611 = vmatpush2.msra.mxu0 0.0
        %1612 = vmatprep.subr.mxu0 0.0
        %1613 = vmatpush2.msra.mxu0 0.0
        %1614 = vmatprep.mubr.f32.mxu0 0.0
        %1615 = vmatmul.mubr.f32.gmra.mxu0 %v1545
        %v1616 = vpop.f32.mrf.mxu0
        %v1617 = vadd.f32 %v821, %v1616
        %v1618 = vpop.f32.mrf.mxu0
        %1619 = vmatprep.mubr.f32.mxu0 0.0
        %1620 = vmatmul.mubr.f32.gmra.mxu0 %v1548
        %v1621 = vpop.f32.mrf.mxu0
        %v1622 = vadd.f32 %v821, %v1621
        %v1623 = vpop.f32.mrf.mxu0
        %1624 = vdwg.mxu0
        %v1625 = vmax.f32 %v1617, 0.0
        %v1626 = vmax.f32 %v1622, 0.0
        %v1628 = vsel %vm909, %v1625, 0
        %v1631 = vsel %vm909, %v1626, 0
        %1633 = vmatprep.subr.mxu0 0.0
        %1634 = vmatpush1.msra.mxu0 0.0
        %1635 = vmatprep.subr.mxu0 0.0
        %1636 = vmatpush1.msra.mxu0 0.0
        %1637 = vmatprep.subr.mxu0 0.0
        %1638 = vmatpush1.msra.mxu0 0.0
        %1639 = vmatprep.subr.mxu0 0.0
        %1640 = vmatpush1.msra.mxu0 0.0
        %1641 = vmatprep.subr.mxu0 0.0
        %1642 = vmatpush1.msra.mxu0 0.0
        %1643 = vmatprep.subr.mxu0 0.0
        %1644 = vmatpush1.msra.mxu0 0.0
        %1645 = vmatprep.subr.mxu0 0.0
        %1646 = vmatpush1.msra.mxu0 0.0
        %1647 = vmatprep.subr.mxu0 0.0
        %1648 = vmatpush1.msra.mxu0 0.0
        %1649 = vmatprep.subr.mxu0 0.0
        %1650 = vmatpush1.msra.mxu0 %v235
        %1651 = vmatprep.subr.mxu0 0.0
        %1652 = vmatpush1.msra.mxu0 %v234
        %1653 = vmatprep.subr.mxu0 0.0
        %1654 = vmatpush1.msra.mxu0 %v233
        %1655 = vmatprep.subr.mxu0 0.0
        %1656 = vmatpush1.msra.mxu0 %v232
        %1657 = vmatprep.subr.mxu0 0.0
        %1658 = vmatpush1.msra.mxu0 %v231
        %1659 = vmatprep.subr.mxu0 0.0
        %1660 = vmatpush1.msra.mxu0 %v230
        %1661 = vmatprep.subr.mxu0 0.0
        %1662 = vmatpush1.msra.mxu0 %v229
        %1663 = vmatprep.subr.mxu0 0.0
        %1664 = vmatpush1.msra.mxu0 %v228
        %1665 = vmatprep.subr.mxu0 0.0
        %1666 = vmatpush2.msra.mxu0 0.0
        %1667 = vmatprep.subr.mxu0 0.0
        %1668 = vmatpush2.msra.mxu0 0.0
        %1669 = vmatprep.subr.mxu0 0.0
        %1670 = vmatpush2.msra.mxu0 0.0
        %1671 = vmatprep.subr.mxu0 0.0
        %1672 = vmatpush2.msra.mxu0 0.0
        %1673 = vmatprep.subr.mxu0 0.0
        %1674 = vmatpush2.msra.mxu0 0.0
        %1675 = vmatprep.subr.mxu0 0.0
        %1676 = vmatpush2.msra.mxu0 0.0
        %1677 = vmatprep.subr.mxu0 0.0
        %1678 = vmatpush2.msra.mxu0 0.0
        %1679 = vmatprep.subr.mxu0 0.0
        %1680 = vmatpush2.msra.mxu0 0.0
        %1681 = vmatprep.subr.mxu0 0.0
        %1682 = vmatpush2.msra.mxu0 0.0
        %1683 = vmatprep.subr.mxu0 0.0
        %1684 = vmatpush2.msra.mxu0 0.0
        %1685 = vmatprep.subr.mxu0 0.0
        %1686 = vmatpush2.msra.mxu0 0.0
        %1687 = vmatprep.subr.mxu0 0.0
        %1688 = vmatpush2.msra.mxu0 0.0
        %1689 = vmatprep.subr.mxu0 0.0
        %1690 = vmatpush2.msra.mxu0 0.0
        %1691 = vmatprep.subr.mxu0 0.0
        %1692 = vmatpush2.msra.mxu0 0.0
        %1693 = vmatprep.subr.mxu0 0.0
        %1694 = vmatpush2.msra.mxu0 0.0
        %1695 = vmatprep.subr.mxu0 0.0
        %1696 = vmatpush2.msra.mxu0 0.0
        %1697 = vmatprep.mubr.f32.mxu0 0.0
        %1698 = vmatmul.mubr.f32.gmra.mxu0 %v1628
        %v1699 = vpop.f32.mrf.mxu0
        %v1700 = vadd.f32 %v908, %v1699
        %v1701 = vpop.f32.mrf.mxu0
        %1702 = vmatprep.mubr.f32.mxu0 0.0
        %1703 = vmatmul.mubr.f32.gmra.mxu0 %v1631
        %v1704 = vpop.f32.mrf.mxu0
        %v1705 = vadd.f32 %v908, %v1704
        %v1706 = vpop.f32.mrf.mxu0
        %1707 = vdwg.mxu0
        %v1708 = vadd.f32 %v1542, %v1700
        %v1709 = vadd.f32 %v1543, %v1705
        %v1710 = vsel %vm296, %v1708, 0.0
        %1711 = vadd.xlane.f32.xlu0 %v1710
        %v1712 = vpop.xlane.xlu0 %1711
        %v1713 = vsel %vm296, %v1709, 0.0
        %1714 = vadd.xlane.f32.xlu0 %v1713
        %v1715 = vpop.xlane.xlu0 %1714
        %v1716 = vmul.f32 %v1712, %v785
        %v1717 = vmul.f32 %v1715, %v785
        %v1718 = vsub.f32 %v1708, %v1716
        %v1719 = vsub.f32 %v1709, %v1717
        %v1720 = vmul.f32 %v1718, %v1718
        %v1721 = vmul.f32 %v1719, %v1719
        %v1722 = vsel %vm296, %v1720, 0.0
        %1723 = vadd.xlane.f32.xlu0 %v1722
        %v1724 = vpop.xlane.xlu0 %1723
        %v1725 = vsel %vm296, %v1721, 0.0
        %1726 = vadd.xlane.f32.xlu0 %v1725
        %v1727 = vpop.xlane.xlu0 %1726
        %v1728 = vmul.f32 %v1724, %v785
        %v1729 = vmul.f32 %v1727, %v785
        %v1730 = vadd.f32 %v1728, 1e-05
        %v1731 = vadd.f32 %v1729, 1e-05
        %v1732 = vrsqrt.pop %v1730
        %v1733 = vrsqrt.pop %v1731
        %v1734 = vmul.f32 %v1718, %v1732
        %v1735 = vmul.f32 %v1719, %v1733
        %v1736 = vmul.f32 %v1734, %v1022
        %v1737 = vmul.f32 %v1735, %v1022
        %v1738 = vadd.f32 %v1736, %v1028
        %v1739 = vadd.f32 %v1737, %v1028
        %v1740 = vmax.f32 %v1738, 0.0
        %v1741 = vmax.f32 %v1739, 0.0
        %v1742 = vld [vmem:[#allocation4 + $0x80] sm:$0xff]
        %v1743 = vld [vmem:[#allocation4 + $0x88] sm:$0xff]
        %v1744 = vld [vmem:[#allocation4 + $0x90] sm:$0xff]
        %v1745 = vld [vmem:[#allocation4 + $0x98] sm:$0xff]
        %v1746 = vld [vmem:[#allocation6 + $0x7] sm:$0x1]
        %v1747 = vlaneseq
        %v1748 = vshrl.u32 %v1747, 7
        %v1749 = vsub.s32 0, %v1748
        %v1750 = vrot.slane %v1746, %v1749
        %v1752 = vsel %vm296, %v1740, 0
        %v1755 = vsel %vm296, %v1741, 0
        %1757 = vmatprep.subr.mxu0 0.0
        %1758 = vmatpush1.msra.mxu0 0.0
        %1759 = vmatprep.subr.mxu0 0.0
        %1760 = vmatpush1.msra.mxu0 0.0
        %1761 = vmatprep.subr.mxu0 0.0
        %1762 = vmatpush1.msra.mxu0 0.0
        %1763 = vmatprep.subr.mxu0 0.0
        %1764 = vmatpush1.msra.mxu0 0.0
        %1765 = vmatprep.subr.mxu0 0.0
        %1766 = vmatpush1.msra.mxu0 0.0
        %1767 = vmatprep.subr.mxu0 0.0
        %1768 = vmatpush1.msra.mxu0 0.0
        %1769 = vmatprep.subr.mxu0 0.0
        %1770 = vmatpush1.msra.mxu0 0.0
        %1771 = vmatprep.subr.mxu0 0.0
        %1772 = vmatpush1.msra.mxu0 0.0
        %1773 = vmatprep.subr.mxu0 0.0
        %1774 = vmatpush1.msra.mxu0 0.0
        %1775 = vmatprep.subr.mxu0 0.0
        %1776 = vmatpush1.msra.mxu0 0.0
        %1777 = vmatprep.subr.mxu0 0.0
        %1778 = vmatpush1.msra.mxu0 0.0
        %1779 = vmatprep.subr.mxu0 0.0
        %1780 = vmatpush1.msra.mxu0 0.0
        %1781 = vmatprep.subr.mxu0 0.0
        %1782 = vmatpush1.msra.mxu0 %v1745
        %1783 = vmatprep.subr.mxu0 0.0
        %1784 = vmatpush1.msra.mxu0 %v1744
        %1785 = vmatprep.subr.mxu0 0.0
        %1786 = vmatpush1.msra.mxu0 %v1743
        %1787 = vmatprep.subr.mxu0 0.0
        %1788 = vmatpush1.msra.mxu0 %v1742
        %1789 = vmatprep.subr.mxu0 0.0
        %1790 = vmatpush2.msra.mxu0 0.0
        %1791 = vmatprep.subr.mxu0 0.0
        %1792 = vmatpush2.msra.mxu0 0.0
        %1793 = vmatprep.subr.mxu0 0.0
        %1794 = vmatpush2.msra.mxu0 0.0
        %1795 = vmatprep.subr.mxu0 0.0
        %1796 = vmatpush2.msra.mxu0 0.0
        %1797 = vmatprep.subr.mxu0 0.0
        %1798 = vmatpush2.msra.mxu0 0.0
        %1799 = vmatprep.subr.mxu0 0.0
        %1800 = vmatpush2.msra.mxu0 0.0
        %1801 = vmatprep.subr.mxu0 0.0
        %1802 = vmatpush2.msra.mxu0 0.0
        %1803 = vmatprep.subr.mxu0 0.0
        %1804 = vmatpush2.msra.mxu0 0.0
        %1805 = vmatprep.subr.mxu0 0.0
        %1806 = vmatpush2.msra.mxu0 0.0
        %1807 = vmatprep.subr.mxu0 0.0
        %1808 = vmatpush2.msra.mxu0 0.0
        %1809 = vmatprep.subr.mxu0 0.0
        %1810 = vmatpush2.msra.mxu0 0.0
        %1811 = vmatprep.subr.mxu0 0.0
        %1812 = vmatpush2.msra.mxu0 0.0
        %1813 = vmatprep.subr.mxu0 0.0
        %1814 = vmatpush2.msra.mxu0 0.0
        %1815 = vmatprep.subr.mxu0 0.0
        %1816 = vmatpush2.msra.mxu0 0.0
        %1817 = vmatprep.subr.mxu0 0.0
        %1818 = vmatpush2.msra.mxu0 0.0
        %1819 = vmatprep.subr.mxu0 0.0
        %1820 = vmatpush2.msra.mxu0 0.0
        %1821 = vmatprep.mubr.f32.mxu0 0.0
        %1822 = vmatmul.mubr.f32.gmra.mxu0 %v1752
        %v1823 = vpop.f32.mrf.mxu0
        %v1824 = vadd.f32 %v1750, %v1823
        %v1825 = vpop.f32.mrf.mxu0
        %1826 = vmatprep.mubr.f32.mxu0 0.0
        %1827 = vmatmul.mubr.f32.gmra.mxu0 %v1755
        %v1828 = vpop.f32.mrf.mxu0
        %v1829 = vadd.f32 %v1750, %v1828
        %v1830 = vpop.f32.mrf.mxu0
        %1831 = vdwg.mxu0
        %v1832 = vsub.f32 0.0, %v1824
        %v1833 = vsub.f32 0.0, %v1829
        %v1834 = vmul.f32 %v1832, 1.442695
        %v1835 = vpow.pop %v1834
        %v1836 = vmul.f32 %v1833, 1.442695
        %v1837 = vpow.pop %v1836
        %v1838 = vadd.f32 %v1835, 1.0
        %v1839 = vadd.f32 %v1837, 1.0
        %v1840 = vrcp.pop %v1838
        %v1841 = vmul.f32 1.0, %v1840
        %v1842 = vrcp.pop %v1839
        %v1843 = vmul.f32 1.0, %v1842
        %1845 = vset.pattern.permute.xlu0 0
        %1846 = vperm.xlu0 %1845, %v1841
        %v1847 = vpop.permute.xlu0 %1846
        %1850 = vset.pattern.permute.xlu0 0
        %1851 = vperm.xlu0 %1850, %v1843
        %v1852 = vpop.permute.xlu0 %1851
        %1854 = vst [vmem:[%s217] sm:$0xff] %v1847
        %1855 = vst [vmem:[%s217 + $0x8] sm:$0xff] %v1852
        %p1856 = scmp.lt.s32.totalorder %s18, 3
        %s1857 = scalar_select %p1856, %s18, 3
        %s1858 = smul.addr %s1857, 2
        %s1859 = smul.addr %s1858, 8
        %s1860 = scalar_lea.vmem %s3, %s1859
        // Predicated region
        $region45: #{tfm_forward.1} parent=31 // pred_check
          %p1861 = pneg %p104
        $region46: #{tfm_forward.1} parent=31 // pred_check_branch
          %1863 = sbr.rel (%p1861) target = $region48
        $region47: #{tfm_forward.1} parent=31 // pred_region
          _
        $region48: #{tfm_forward.1} parent=31 // pred_fallthru
          _
      $region32: #{tfm_forward.1} parent=5 // pred_fallthru
        _
      %p1864 = scmp.le.s32.totalorder 2, %s13
      // Predicated region
      $region49: #{tfm_forward.1} parent=5 // pred_check
        %p1865 = pneg %p1864
      $region50: #{tfm_forward.1} parent=5 // pred_check_branch
        %1867 = sbr.rel (%p1865) target = $region52
      $region51: #{tfm_forward.1} parent=5 // pred_region
        %s1868 = ssub.s32 %s13, 2
        // Predicated region
        $region53: #{tfm_forward.1} parent=51 // pred_check
          %p1869 = pneg %p110
        $region54: #{tfm_forward.1} parent=51 // pred_check_branch
          %1871 = sbr.rel (%p1869) target = $region56
        $region55: #{tfm_forward.1} parent=51 // pred_region
          %p1872 = scmp.lt.s32.totalorder %s19, 3
          %s1873 = scalar_select %p1872, %s19, 3
          %s1874 = smul.addr %s1873, 2
          %s1875 = smul.addr %s1874, 8
          %s1876 = scalar_lea.vmem %s3, %s1875
        $region56: #{tfm_forward.1} parent=51 // pred_fallthru
          _
      $region52: #{tfm_forward.1} parent=5 // pred_fallthru
        _
    $region6: #{tfm_forward.1} parent=1 // loop_footer
      %s17 = sadd.s32 1, %s13
    $region7: #{tfm_forward.1} parent=1 // loop_footer_branch
      %12 = sbr.rel target = $region3
    $region8: #{tfm_forward.1} parent=1 // loop_exit
      _
    %1877 = vsyncpa [#allocation3], 1
    %s1878 = scalar_lea.sflag [#allocation3], 1
    %1879 = vsyncpa %s1878, 1
    %1880 = vsyncpa [#allocation5], 1

</llo_original>
